<compile_context>
chip_gen: v7x
topology: tpu7x:2x2x1
jax: 0.10.0
libtpu: 0.0.40
codegen_flags: <defaults>
</compile_context>

<pallas_src>
import functools

import jax
import jax.numpy as jnp
import numpy as np
from jax import lax
from jax.experimental import pallas as pl
from jax.experimental.pallas import tpu as pltpu  # noqa: F401  (TPU backend)

_EPS = 1e-12  # F.normalize default eps


# ------------------------------ fused kernel ------------------------------- #
def _fused_kernel(key_ref, query_ref, w_ref, updq_ref, protos_ref, loss_ref):
    # key_ref:    (B, D, N)    channel-first keys   (whole batch in VMEM)
    # query_ref:  (B, fd, n)   channel-first queries
    # w_ref:      (M, D)       Mheads weight
    # updq_ref:   (fd, B*n)    lane-dense updated-query slab
    # protos_ref: (B, M, D)    raw prototypes
    # loss_ref:   (1, 3)       [fea_loss, cst_loss, dis_loss]
    B, D, N = key_ref.shape
    _, fd, n = query_ref.shape
    M = w_ref.shape[0]

    w = w_ref[...]                                              # (M, D)

    # Loop-invariant constants (hoisted: JAX does not CSE broadcast_in_dim).
    row_tok = lax.broadcasted_iota(jnp.int32, (M, n), 0)        # (M, n)
    ri = lax.broadcasted_iota(jnp.int32, (M, M), 0)
    ci = lax.broadcasted_iota(jnp.int32, (M, M), 1)
    upper = ci > ri                                             # strict upper triangle
    ones_row = jnp.ones((1, D), jnp.float32)

    fea_acc = jnp.zeros((1, 1), jnp.float32)
    dis_acc = jnp.zeros((1, 1), jnp.float32)
    cst_acc = jnp.zeros((1, 1), jnp.float32)
    pn_prev = None

    for b in range(B):                                          # B tiny & static -> unroll
        key_cf = key_ref[b]                                     # (D, N)
        q_cf = query_ref[b]                                     # (fd, n)

        # ---- Mheads linear (M, N orientation) + softmax over tokens ----
        logits = jnp.dot(w, key_cf, preferred_element_type=jnp.float32)   # (M, N)
        mx = jnp.max(logits, axis=-1, keepdims=True)
        e = jnp.exp(logits - mx)
        attn = e / jnp.sum(e, axis=-1, keepdims=True)           # exact: protos is an output

        # protos[m, d] = sum_t attn[m, t] * key[d, t]
        protos = lax.dot_general(attn, key_cf, (((1,), (1,)), ((), ())),
                                 preferred_element_type=jnp.float32)      # (M, D)
        protos_ref[b] = protos

        # ---- F.normalize(protos, dim=-1):  x * rsqrt(max(|x|^2, eps^2)) ----
        psq = jnp.sum(protos * protos, axis=-1, keepdims=True)
        pn = protos * lax.rsqrt(jnp.maximum(psq, _EPS * _EPS))            # (M, D)

        # ---- score = pn . q ; softmax over prototypes (axis 0 = M) ----
        score = jnp.dot(pn, q_cf, preferred_element_type=jnp.float32)     # (M, n)
        smx = jnp.max(score, axis=0, keepdims=True)
        se = jnp.exp(score - smx)
        # approx reciprocal is safe: per-token scale cancels under the later
        # L2 normalization and does not change the per-token argmax.
        sm = se * pl.reciprocal(jnp.sum(se, axis=0, keepdims=True), approx=True)

        # new_query[d, t] = sum_m sm[m, t] * pn[m, d]; then L2-normalize over d
        new_q = lax.dot_general(pn, sm, (((0,), (0,)), ((), ())),
                                preferred_element_type=jnp.float32)       # (D, n)
        nsq = jnp.sum(new_q * new_q, axis=0, keepdims=True)
        new_qn = new_q * lax.rsqrt(jnp.maximum(nsq, _EPS * _EPS))

        # residual add; batches stacked along the lane axis (lane-dense slab)
        updq_ref[:, b * n:(b + 1) * n] = new_qn + q_cf

        # ---- nearest prototype (argmax over M, first index on ties) ----
        mv = jnp.max(sm, axis=0, keepdims=True)                           # (1, n)
        idx = jnp.min(jnp.where(sm == mv, row_tok, M), axis=0, keepdims=True)
        onehot = (row_tok == idx).astype(jnp.float32)                     # (M, n)
        pos = lax.dot_general(pn, onehot, (((0,), (0,)), ((), ())),
                              preferred_element_type=jnp.float32)         # (D, n)
        diff2 = (q_cf - pos) ** 2
        fea_acc += jnp.sum(jnp.sum(diff2, axis=0, keepdims=True),
                           axis=1, keepdims=True)

        # ---- dis loss: d2[i,j] = |pn_i|^2 + |pn_j|^2 - 2 pn_i.pn_j ----
        gram = lax.dot_general(pn, pn, (((1,), (1,)), ((), ())),
                               preferred_element_type=jnp.float32)        # (M, M)
        pp = pn * pn
        sq_row = jnp.sum(pp, axis=-1, keepdims=True)                      # (M, 1)
        sq_col = lax.dot_general(ones_row, pp, (((1,), (1,)), ((), ())),
                                 preferred_element_type=jnp.float32)      # (1, M)
        d2 = sq_row + sq_col - 2.0 * gram
        dis = 1.0 - d2
        dis = jnp.where((dis > 0.0) & upper, dis, 0.0)                    # relu + triu(k=1)
        dis_acc += jnp.sum(jnp.sum(dis, axis=0, keepdims=True),
                           axis=1, keepdims=True)

        # ---- cst loss partial: adjacent-batch prototype drift ----
        if b > 0:
            dpn = pn - pn_prev
            cst_acc += jnp.sum(jnp.sum(dpn * dpn, axis=0, keepdims=True),
                               axis=1, keepdims=True)
        pn_prev = pn

    fea = fea_acc * (1.0 / (B * n * fd))                # MSE mean
    dis = dis_acc * (2.0 / (M * (M - 1) * B))           # per-batch scale + batch mean
    if B > 1:
        cst = cst_acc * (1.0 / ((B - 1) * M))           # mean over (B-1, M)
    else:
        cst = jnp.zeros((1, 1), jnp.float32)

    loss_ref[:, 0:1] = fea
    loss_ref[:, 1:2] = cst
    loss_ref[:, 2:3] = dis


# -------------------------------- wrapper ----------------------------------- #
@functools.partial(jax.jit, static_argnames=("proto_size",))
def meta_prototype_forward(key, query, mheads_w, *, proto_size):
    """Returns (updated_query, protos, fea_loss, cst_loss, dis_loss)."""
    B, dims, h, w = key.shape
    _, fd, h_, w_ = query.shape
    N = h * w
    n = h_ * w_
    M = proto_size

    # channel-first (B, C, N): free reshapes of NCHW, no wrapper transposes on inputs.
    key_cf = key.reshape(B, dims, N).astype(jnp.float32)
    query_cf = query.reshape(B, fd, n).astype(jnp.float32)

    flops = 2 * B * (M * dims * N        # Mheads linear
                     + M * dims * N      # proto aggregation
                     + M * dims * n      # score
                     + M * dims * n      # new_query
                     + M * dims * n      # pos one-hot matmul
                     + M * M * dims)     # gram
    transcendentals = B * (M * N + M * n)
    bytes_accessed = 4 * (B * dims * N + B * fd * n + M * dims
                          + fd * B * n + B * M * dims + 3)

    updated_slab, protos, losses = pl.pallas_call(
        _fused_kernel,
        out_shape=(
            jax.ShapeDtypeStruct((fd, B * n), jnp.float32),    # lane-dense updated query
            jax.ShapeDtypeStruct((B, M, dims), jnp.float32),   # raw prototypes
            jax.ShapeDtypeStruct((1, 3), jnp.float32),         # [fea, cst, dis]
        ),
        cost_estimate=pl.CostEstimate(flops=flops,
                                      transcendentals=transcendentals,
                                      bytes_accessed=bytes_accessed),
    )(key_cf, query_cf, mheads_w.astype(jnp.float32))

    fea_loss = losses[0, 0]
    cst_loss = losses[0, 1:2]          # shape (1,)  (matches .unsqueeze(0))
    dis_loss = losses[0, 2]

    # un-stack the lane-dense slab back to NCHW (tiny wrapper-side transpose)
    updated_query = jnp.transpose(updated_slab.reshape(fd, B, n),
                                  (1, 0, 2)).reshape(B, fd, h_, w_)
    return updated_query, protos, fea_loss, cst_loss, dis_loss


# ---------------------------- pure-JAX reference ---------------------------- #
def _reference_forward(key, query, mheads_w, proto_size):
    B, dims, h, w = key.shape
    _, fd, h_, w_ = query.shape
    M = proto_size
    key_t = jnp.transpose(key, (0, 2, 3, 1)).reshape(B, h * w, dims)
    query_t = jnp.transpose(query, (0, 2, 3, 1)).reshape(B, -1, fd)

    logits = jnp.einsum("bnd,md->bnm", key_t, mheads_w)
    attn = jax.nn.softmax(logits, axis=1)
    protos = jnp.einsum("bnm,bnd->bmd", attn, key_t)

    pn = protos / jnp.maximum(jnp.linalg.norm(protos, axis=-1, keepdims=True), _EPS)
    score = jnp.einsum("bnd,bmd->bnm", query_t, pn)
    sm = jax.nn.softmax(score, axis=-1)
    new_q = jnp.einsum("bnm,bmd->bnd", sm, pn)
    new_qn = new_q / jnp.maximum(jnp.linalg.norm(new_q, axis=-1, keepdims=True), _EPS)
    upd = new_qn + query_t

    idx = jnp.argmax(sm, axis=-1)
    pos = jnp.take_along_axis(pn, idx[:, :, None], axis=1)
    fea_loss = jnp.mean((query_t - pos) ** 2)

    d2 = jnp.sum((pn[:, None, :, :] - pn[:, :, None, :]) ** 2, axis=-1)
    dis = 1.0 - d2
    dis = dis * (dis > 0).astype(dis.dtype)
    dis = jnp.triu(dis, k=1)
    dis_loss = jnp.mean(jnp.sum(dis, axis=(1, 2)) * 2.0 / (M * (M - 1)))
    cst_loss = jnp.mean(jnp.sum((pn[1:] - pn[:-1]) ** 2, axis=-1))[None]

    updated_query = jnp.transpose(upd, (0, 2, 1)).reshape(B, fd, h_, w_)
    return updated_query, protos, fea_loss, cst_loss, dis_loss


# ---------------------------------- main ------------------------------------ #
if __name__ == "__main__":
    # Module config: proto_size=8, feature_dim=32, key_dim=32
    PROTO_SIZE, FEATURE_DIM, KEY_DIM = 8, 32, 32
    B, H, W = 2, 8, 8  # small shapes

    rng = jax.random.PRNGKey(0)
    k_key, k_query, k_w = jax.random.split(rng, 3)
    key_in = jax.random.normal(k_key, (B, KEY_DIM, H, W), dtype=jnp.float32)
    query_in = jax.random.normal(k_query, (B, FEATURE_DIM, H, W), dtype=jnp.float32)
    # nn.Linear(key_dim, proto_size, bias=False).weight has shape (proto_size, key_dim)
    bound = 1.0 / np.sqrt(KEY_DIM)
    mheads_w = jax.random.uniform(
        k_w, (PROTO_SIZE, KEY_DIM), minval=-bound, maxval=bound, dtype=jnp.float32)

    outs = meta_prototype_forward(key_in, query_in, mheads_w, proto_size=PROTO_SIZE)
    outs = jax.block_until_ready(outs)
    upd, protos, fea_loss, cst_loss, dis_loss = outs

    ref = _reference_forward(key_in, query_in, mheads_w, PROTO_SIZE)
    names = ["updated_query", "protos", "fea_loss", "cst_loss", "dis_loss"]
    for name, a, b in zip(names, outs, ref):
        np.testing.assert_allclose(np.asarray(a), np.asarray(b),
                                   rtol=2e-3, atol=2e-3, err_msg=name)

    assert upd.shape == (B, FEATURE_DIM, H, W)
    assert protos.shape == (B, PROTO_SIZE, KEY_DIM)
    assert cst_loss.shape == (1,)
    print("KERNEL_OK")
</pallas_src>

<mosaic_0001>
module attributes {stable_mosaic.version = 11 : i64} {
  func.func @_fused_kernel(%arg0: memref<2x32x64xf32, #tpu.memory_space<vmem>>, %arg1: memref<2x32x64xf32, #tpu.memory_space<vmem>>, %arg2: memref<8x32xf32, #tpu.memory_space<vmem>>, %arg3: memref<32x128xf32, #tpu.memory_space<vmem>>, %arg4: memref<2x8x32xf32, #tpu.memory_space<vmem>>, %arg5: memref<1x3xf32, #tpu.memory_space<vmem>>) attributes {dimension_semantics = [], scalar_prefetch = 0 : i64, scratch_operands = 0 : i64, tpu.core_type = #tpu.core_type<tc>} {
    %c0 = arith.constant 0 : index
    %c0_0 = arith.constant 0 : index
    %0 = vector.load %arg2[%c0, %c0_0] : memref<8x32xf32, #tpu.memory_space<vmem>>, vector<8x32xf32>
    %1 = tpu.iota {dimensions = array<i32: 0>} : vector<8x64xi32>
    %2 = tpu.iota {dimensions = array<i32: 0>} : vector<8x8xi32>
    %3 = tpu.iota {dimensions = array<i32: 1>} : vector<8x8xi32>
    %4 = arith.cmpi sgt, %3, %2 : vector<8x8xi32>
    %cst = arith.constant 1.000000e+00 : f32
    %5 = vector.broadcast %cst : f32 to vector<1x32xf32>
    %cst_1 = arith.constant 0.000000e+00 : f32
    %6 = vector.broadcast %cst_1 : f32 to vector<1x1xf32>
    %cst_2 = arith.constant 0.000000e+00 : f32
    %7 = vector.broadcast %cst_2 : f32 to vector<1x1xf32>
    %cst_3 = arith.constant 0.000000e+00 : f32
    %8 = vector.broadcast %cst_3 : f32 to vector<1x1xf32>
    %c0_4 = arith.constant 0 : index
    %c0_5 = arith.constant 0 : index
    %c0_6 = arith.constant 0 : index
    %9 = vector.load %arg0[%c0_4, %c0_5, %c0_6] : memref<2x32x64xf32, #tpu.memory_space<vmem>>, vector<1x32x64xf32>
    %10 = vector.shape_cast %9 : vector<1x32x64xf32> to vector<32x64xf32>
    %c0_7 = arith.constant 0 : index
    %c0_8 = arith.constant 0 : index
    %c0_9 = arith.constant 0 : index
    %11 = vector.load %arg1[%c0_7, %c0_8, %c0_9] : memref<2x32x64xf32, #tpu.memory_space<vmem>>, vector<1x32x64xf32>
    %12 = vector.shape_cast %11 : vector<1x32x64xf32> to vector<32x64xf32>
    %cst_10 = arith.constant dense<0.000000e+00> : vector<8x64xf32>
    %13 = tpu.matmul %0, %10, %cst_10 {dimension_numbers = #tpu.dot_dimension_numbers<[1], [0], [0], [1], [0, 0, 1, 1], [], []>} : vector<8x32xf32>, vector<32x64xf32>, vector<8x64xf32> -> vector<8x64xf32>
    %cst_11 = arith.constant dense<0xFF800000> : vector<8xf32>
    %14 = vector.multi_reduction <maximumf>, %13, %cst_11 [1] : vector<8x64xf32> to vector<8xf32>
    %15 = vector.shape_cast %14 : vector<8xf32> to vector<8x1xf32>
    %16 = vector.broadcast %15 : vector<8x1xf32> to vector<8x64xf32>
    %17 = arith.subf %13, %16 : vector<8x64xf32>
    %18 = math.exp %17 : vector<8x64xf32>
    %cst_12 = arith.constant dense<0.000000e+00> : vector<8xf32>
    %19 = vector.multi_reduction <add>, %18, %cst_12 [1] : vector<8x64xf32> to vector<8xf32>
    %20 = vector.shape_cast %19 : vector<8xf32> to vector<8x1xf32>
    %21 = vector.broadcast %20 : vector<8x1xf32> to vector<8x64xf32>
    %22 = arith.divf %18, %21 : vector<8x64xf32>
    %cst_13 = arith.constant dense<0.000000e+00> : vector<8x32xf32>
    %23 = tpu.matmul %22, %10, %cst_13 {dimension_numbers = #tpu.dot_dimension_numbers<[1], [1], [0], [0], [0, 0, 1, 0], [], []>} : vector<8x64xf32>, vector<32x64xf32>, vector<8x32xf32> -> vector<8x32xf32>
    %c0_14 = arith.constant 0 : index
    %c0_15 = arith.constant 0 : index
    %c0_16 = arith.constant 0 : index
    %24 = vector.load %arg4[%c0_14, %c0_15, %c0_16] : memref<2x8x32xf32, #tpu.memory_space<vmem>>, vector<1x8x32xf32>
    %25 = vector.shape_cast %24 : vector<1x8x32xf32> to vector<8x32xf32>
    %26 = vector.shape_cast %23 : vector<8x32xf32> to vector<1x8x32xf32>
    tpu.vector_store %arg4[%c0_14, %c0_15, %c0_16], %26 {strides = array<i32>} : memref<2x8x32xf32, #tpu.memory_space<vmem>>, vector<1x8x32xf32>,
    %27 = arith.mulf %23, %23 : vector<8x32xf32>
    %cst_17 = arith.constant dense<0.000000e+00> : vector<8xf32>
    %28 = vector.multi_reduction <add>, %27, %cst_17 [1] : vector<8x32xf32> to vector<8xf32>
    %29 = vector.shape_cast %28 : vector<8xf32> to vector<8x1xf32>
    %cst_18 = arith.constant 1.000000e-24 : f32
    %30 = vector.broadcast %cst_18 : f32 to vector<8x1xf32>
    %31 = arith.maximumf %29, %30 : vector<8x1xf32>
    %32 = math.rsqrt %31 : vector<8x1xf32>
    %33 = vector.broadcast %32 : vector<8x1xf32> to vector<8x32xf32>
    %34 = arith.mulf %23, %33 : vector<8x32xf32>
    %cst_19 = arith.constant dense<0.000000e+00> : vector<8x64xf32>
    %35 = tpu.matmul %34, %12, %cst_19 {dimension_numbers = #tpu.dot_dimension_numbers<[1], [0], [0], [1], [0, 0, 1, 1], [], []>} : vector<8x32xf32>, vector<32x64xf32>, vector<8x64xf32> -> vector<8x64xf32>
    %cst_20 = arith.constant dense<0xFF800000> : vector<64xf32>
    %36 = vector.multi_reduction <maximumf>, %35, %cst_20 [0] : vector<8x64xf32> to vector<64xf32>
    %37 = vector.shape_cast %36 : vector<64xf32> to vector<1x64xf32>
    %38 = vector.broadcast %37 : vector<1x64xf32> to vector<8x64xf32>
    %39 = arith.subf %35, %38 : vector<8x64xf32>
    %40 = math.exp %39 : vector<8x64xf32>
    %cst_21 = arith.constant dense<0.000000e+00> : vector<64xf32>
    %41 = vector.multi_reduction <add>, %40, %cst_21 [0] : vector<8x64xf32> to vector<64xf32>
    %42 = vector.shape_cast %41 : vector<64xf32> to vector<1x64xf32>
    %43 = tpu.reciprocal %42 {approx = true} : vector<1x64xf32> -> vector<1x64xf32>
    %44 = vector.broadcast %43 : vector<1x64xf32> to vector<8x64xf32>
    %45 = arith.mulf %40, %44 : vector<8x64xf32>
    %cst_22 = arith.constant dense<0.000000e+00> : vector<32x64xf32>
    %46 = tpu.matmul %34, %45, %cst_22 {dimension_numbers = #tpu.dot_dimension_numbers<[0], [0], [1], [1], [0, 1, 1, 1], [], []>} : vector<8x32xf32>, vector<8x64xf32>, vector<32x64xf32> -> vector<32x64xf32>
    %47 = arith.mulf %46, %46 : vector<32x64xf32>
    %cst_23 = arith.constant dense<0.000000e+00> : vector<64xf32>
    %48 = vector.multi_reduction <add>, %47, %cst_23 [0] : vector<32x64xf32> to vector<64xf32>
    %49 = vector.shape_cast %48 : vector<64xf32> to vector<1x64xf32>
    %cst_24 = arith.constant 1.000000e-24 : f32
    %50 = vector.broadcast %cst_24 : f32 to vector<1x64xf32>
    %51 = arith.maximumf %49, %50 : vector<1x64xf32>
    %52 = math.rsqrt %51 : vector<1x64xf32>
    %53 = vector.broadcast %52 : vector<1x64xf32> to vector<32x64xf32>
    %54 = arith.mulf %46, %53 : vector<32x64xf32>
    %55 = arith.addf %54, %12 : vector<32x64xf32>
    %c0_25 = arith.constant 0 : index
    %c0_26 = arith.constant 0 : index
    %56 = vector.load %arg3[%c0_25, %c0_26] : memref<32x128xf32, #tpu.memory_space<vmem>>, vector<32x64xf32>
    tpu.vector_store %arg3[%c0_25, %c0_26], %55 {strides = array<i32>} : memref<32x128xf32, #tpu.memory_space<vmem>>, vector<32x64xf32>,
    %cst_27 = arith.constant dense<0xFF800000> : vector<64xf32>
    %57 = vector.multi_reduction <maximumf>, %45, %cst_27 [0] : vector<8x64xf32> to vector<64xf32>
    %58 = vector.shape_cast %57 : vector<64xf32> to vector<1x64xf32>
    %59 = vector.broadcast %58 : vector<1x64xf32> to vector<8x64xf32>
    %60 = arith.cmpf oeq, %45, %59 : vector<8x64xf32>
    %c8_i32 = arith.constant 8 : i32
    %61 = vector.broadcast %c8_i32 : i32 to vector<8x64xi32>
    %62 = arith.select %60, %1, %61 : vector<8x64xi1>, vector<8x64xi32>
    %cst_28 = arith.constant dense<2147483647> : vector<64xi32>
    %63 = vector.multi_reduction <minsi>, %62, %cst_28 [0] : vector<8x64xi32> to vector<64xi32>
    %64 = vector.shape_cast %63 : vector<64xi32> to vector<1x64xi32>
    %65 = vector.broadcast %64 : vector<1x64xi32> to vector<8x64xi32>
    %66 = arith.cmpi eq, %1, %65 : vector<8x64xi32>
    %67 = arith.extui %66 : vector<8x64xi1> to vector<8x64xi32>
    %68 = arith.sitofp %67 : vector<8x64xi32> to vector<8x64xf32>
    %cst_29 = arith.constant dense<0.000000e+00> : vector<32x64xf32>
    %69 = tpu.matmul %34, %68, %cst_29 {dimension_numbers = #tpu.dot_dimension_numbers<[0], [0], [1], [1], [0, 1, 1, 1], [], []>} : vector<8x32xf32>, vector<8x64xf32>, vector<32x64xf32> -> vector<32x64xf32>
    %70 = arith.subf %12, %69 : vector<32x64xf32>
    %71 = arith.mulf %70, %70 : vector<32x64xf32>
    %cst_30 = arith.constant dense<0.000000e+00> : vector<64xf32>
    %72 = vector.multi_reduction <add>, %71, %cst_30 [0] : vector<32x64xf32> to vector<64xf32>
    %73 = vector.shape_cast %72 : vector<64xf32> to vector<1x64xf32>
    %cst_31 = arith.constant dense<0.000000e+00> : vector<1xf32>
    %74 = vector.multi_reduction <add>, %73, %cst_31 [1] : vector<1x64xf32> to vector<1xf32>
    %75 = vector.shape_cast %74 : vector<1xf32> to vector<1x1xf32>
    %76 = arith.addf %6, %75 : vector<1x1xf32>
    %cst_32 = arith.constant dense<0.000000e+00> : vector<8x8xf32>
    %77 = tpu.matmul %34, %34, %cst_32 {dimension_numbers = #tpu.dot_dimension_numbers<[1], [1], [0], [0], [0, 0, 1, 0], [], []>} : vector<8x32xf32>, vector<8x32xf32>, vector<8x8xf32> -> vector<8x8xf32>
    %78 = arith.mulf %34, %34 : vector<8x32xf32>
    %cst_33 = arith.constant dense<0.000000e+00> : vector<8xf32>
    %79 = vector.multi_reduction <add>, %78, %cst_33 [1] : vector<8x32xf32> to vector<8xf32>
    %80 = vector.shape_cast %79 : vector<8xf32> to vector<8x1xf32>
    %cst_34 = arith.constant dense<0.000000e+00> : vector<1x8xf32>
    %81 = tpu.matmul %5, %78, %cst_34 {dimension_numbers = #tpu.dot_dimension_numbers<[1], [1], [0], [0], [0, 0, 1, 0], [], []>} : vector<1x32xf32>, vector<8x32xf32>, vector<1x8xf32> -> vector<1x8xf32>
    %82 = vector.broadcast %80 : vector<8x1xf32> to vector<8x8xf32>
    %83 = vector.broadcast %81 : vector<1x8xf32> to vector<8x8xf32>
    %84 = arith.addf %82, %83 : vector<8x8xf32>
    %cst_35 = arith.constant 2.000000e+00 : f32
    %85 = vector.broadcast %cst_35 : f32 to vector<8x8xf32>
    %86 = arith.mulf %85, %77 : vector<8x8xf32>
    %87 = arith.subf %84, %86 : vector<8x8xf32>
    %cst_36 = arith.constant 1.000000e+00 : f32
    %88 = vector.broadcast %cst_36 : f32 to vector<8x8xf32>
    %89 = arith.subf %88, %87 : vector<8x8xf32>
    %cst_37 = arith.constant 0.000000e+00 : f32
    %90 = vector.broadcast %cst_37 : f32 to vector<8x8xf32>
    %91 = arith.cmpf ogt, %89, %90 : vector<8x8xf32>
    %92 = arith.andi %91, %4 : vector<8x8xi1>
    %cst_38 = arith.constant 0.000000e+00 : f32
    %93 = vector.broadcast %cst_38 : f32 to vector<8x8xf32>
    %94 = arith.select %92, %89, %93 : vector<8x8xi1>, vector<8x8xf32>
    %cst_39 = arith.constant dense<0.000000e+00> : vector<8xf32>
    %95 = vector.multi_reduction <add>, %94, %cst_39 [0] : vector<8x8xf32> to vector<8xf32>
    %96 = vector.shape_cast %95 : vector<8xf32> to vector<1x8xf32>
    %cst_40 = arith.constant dense<0.000000e+00> : vector<1xf32>
    %97 = vector.multi_reduction <add>, %96, %cst_40 [1] : vector<1x8xf32> to vector<1xf32>
    %98 = vector.shape_cast %97 : vector<1xf32> to vector<1x1xf32>
    %99 = arith.addf %7, %98 : vector<1x1xf32>
    %c1 = arith.constant 1 : index
    %c0_41 = arith.constant 0 : index
    %c0_42 = arith.constant 0 : index
    %100 = vector.load %arg0[%c1, %c0_41, %c0_42] : memref<2x32x64xf32, #tpu.memory_space<vmem>>, vector<1x32x64xf32>
    %101 = vector.shape_cast %100 : vector<1x32x64xf32> to vector<32x64xf32>
    %c1_43 = arith.constant 1 : index
    %c0_44 = arith.constant 0 : index
    %c0_45 = arith.constant 0 : index
    %102 = vector.load %arg1[%c1_43, %c0_44, %c0_45] : memref<2x32x64xf32, #tpu.memory_space<vmem>>, vector<1x32x64xf32>
    %103 = vector.shape_cast %102 : vector<1x32x64xf32> to vector<32x64xf32>
    %cst_46 = arith.constant dense<0.000000e+00> : vector<8x64xf32>
    %104 = tpu.matmul %0, %101, %cst_46 {dimension_numbers = #tpu.dot_dimension_numbers<[1], [0], [0], [1], [0, 0, 1, 1], [], []>} : vector<8x32xf32>, vector<32x64xf32>, vector<8x64xf32> -> vector<8x64xf32>
    %cst_47 = arith.constant dense<0xFF800000> : vector<8xf32>
    %105 = vector.multi_reduction <maximumf>, %104, %cst_47 [1] : vector<8x64xf32> to vector<8xf32>
    %106 = vector.shape_cast %105 : vector<8xf32> to vector<8x1xf32>
    %107 = vector.broadcast %106 : vector<8x1xf32> to vector<8x64xf32>
    %108 = arith.subf %104, %107 : vector<8x64xf32>
    %109 = math.exp %108 : vector<8x64xf32>
    %cst_48 = arith.constant dense<0.000000e+00> : vector<8xf32>
    %110 = vector.multi_reduction <add>, %109, %cst_48 [1] : vector<8x64xf32> to vector<8xf32>
    %111 = vector.shape_cast %110 : vector<8xf32> to vector<8x1xf32>
    %112 = vector.broadcast %111 : vector<8x1xf32> to vector<8x64xf32>
    %113 = arith.divf %109, %112 : vector<8x64xf32>
    %cst_49 = arith.constant dense<0.000000e+00> : vector<8x32xf32>
    %114 = tpu.matmul %113, %101, %cst_49 {dimension_numbers = #tpu.dot_dimension_numbers<[1], [1], [0], [0], [0, 0, 1, 0], [], []>} : vector<8x64xf32>, vector<32x64xf32>, vector<8x32xf32> -> vector<8x32xf32>
    %c1_50 = arith.constant 1 : index
    %c0_51 = arith.constant 0 : index
    %c0_52 = arith.constant 0 : index
    %115 = vector.load %arg4[%c1_50, %c0_51, %c0_52] : memref<2x8x32xf32, #tpu.memory_space<vmem>>, vector<1x8x32xf32>
    %116 = vector.shape_cast %115 : vector<1x8x32xf32> to vector<8x32xf32>
    %117 = vector.shape_cast %114 : vector<8x32xf32> to vector<1x8x32xf32>
    tpu.vector_store %arg4[%c1_50, %c0_51, %c0_52], %117 {strides = array<i32>} : memref<2x8x32xf32, #tpu.memory_space<vmem>>, vector<1x8x32xf32>,
    %118 = arith.mulf %114, %114 : vector<8x32xf32>
    %cst_53 = arith.constant dense<0.000000e+00> : vector<8xf32>
    %119 = vector.multi_reduction <add>, %118, %cst_53 [1] : vector<8x32xf32> to vector<8xf32>
    %120 = vector.shape_cast %119 : vector<8xf32> to vector<8x1xf32>
    %cst_54 = arith.constant 1.000000e-24 : f32
    %121 = vector.broadcast %cst_54 : f32 to vector<8x1xf32>
    %122 = arith.maximumf %120, %121 : vector<8x1xf32>
    %123 = math.rsqrt %122 : vector<8x1xf32>
    %124 = vector.broadcast %123 : vector<8x1xf32> to vector<8x32xf32>
    %125 = arith.mulf %114, %124 : vector<8x32xf32>
    %cst_55 = arith.constant dense<0.000000e+00> : vector<8x64xf32>
    %126 = tpu.matmul %125, %103, %cst_55 {dimension_numbers = #tpu.dot_dimension_numbers<[1], [0], [0], [1], [0, 0, 1, 1], [], []>} : vector<8x32xf32>, vector<32x64xf32>, vector<8x64xf32> -> vector<8x64xf32>
    %cst_56 = arith.constant dense<0xFF800000> : vector<64xf32>
    %127 = vector.multi_reduction <maximumf>, %126, %cst_56 [0] : vector<8x64xf32> to vector<64xf32>
    %128 = vector.shape_cast %127 : vector<64xf32> to vector<1x64xf32>
    %129 = vector.broadcast %128 : vector<1x64xf32> to vector<8x64xf32>
    %130 = arith.subf %126, %129 : vector<8x64xf32>
    %131 = math.exp %130 : vector<8x64xf32>
    %cst_57 = arith.constant dense<0.000000e+00> : vector<64xf32>
    %132 = vector.multi_reduction <add>, %131, %cst_57 [0] : vector<8x64xf32> to vector<64xf32>
    %133 = vector.shape_cast %132 : vector<64xf32> to vector<1x64xf32>
    %134 = tpu.reciprocal %133 {approx = true} : vector<1x64xf32> -> vector<1x64xf32>
    %135 = vector.broadcast %134 : vector<1x64xf32> to vector<8x64xf32>
    %136 = arith.mulf %131, %135 : vector<8x64xf32>
    %cst_58 = arith.constant dense<0.000000e+00> : vector<32x64xf32>
    %137 = tpu.matmul %125, %136, %cst_58 {dimension_numbers = #tpu.dot_dimension_numbers<[0], [0], [1], [1], [0, 1, 1, 1], [], []>} : vector<8x32xf32>, vector<8x64xf32>, vector<32x64xf32> -> vector<32x64xf32>
    %138 = arith.mulf %137, %137 : vector<32x64xf32>
    %cst_59 = arith.constant dense<0.000000e+00> : vector<64xf32>
    %139 = vector.multi_reduction <add>, %138, %cst_59 [0] : vector<32x64xf32> to vector<64xf32>
    %140 = vector.shape_cast %139 : vector<64xf32> to vector<1x64xf32>
    %cst_60 = arith.constant 1.000000e-24 : f32
    %141 = vector.broadcast %cst_60 : f32 to vector<1x64xf32>
    %142 = arith.maximumf %140, %141 : vector<1x64xf32>
    %143 = math.rsqrt %142 : vector<1x64xf32>
    %144 = vector.broadcast %143 : vector<1x64xf32> to vector<32x64xf32>
    %145 = arith.mulf %137, %144 : vector<32x64xf32>
    %146 = arith.addf %145, %103 : vector<32x64xf32>
    %c0_61 = arith.constant 0 : index
    %c64 = arith.constant 64 : index
    %147 = vector.load %arg3[%c0_61, %c64] : memref<32x128xf32, #tpu.memory_space<vmem>>, vector<32x64xf32>
    tpu.vector_store %arg3[%c0_61, %c64], %146 {strides = array<i32>} : memref<32x128xf32, #tpu.memory_space<vmem>>, vector<32x64xf32>,
    %cst_62 = arith.constant dense<0xFF800000> : vector<64xf32>
    %148 = vector.multi_reduction <maximumf>, %136, %cst_62 [0] : vector<8x64xf32> to vector<64xf32>
    %149 = vector.shape_cast %148 : vector<64xf32> to vector<1x64xf32>
    %150 = vector.broadcast %149 : vector<1x64xf32> to vector<8x64xf32>
    %151 = arith.cmpf oeq, %136, %150 : vector<8x64xf32>
    %c8_i32_63 = arith.constant 8 : i32
    %152 = vector.broadcast %c8_i32_63 : i32 to vector<8x64xi32>
    %153 = arith.select %151, %1, %152 : vector<8x64xi1>, vector<8x64xi32>
    %cst_64 = arith.constant dense<2147483647> : vector<64xi32>
    %154 = vector.multi_reduction <minsi>, %153, %cst_64 [0] : vector<8x64xi32> to vector<64xi32>
    %155 = vector.shape_cast %154 : vector<64xi32> to vector<1x64xi32>
    %156 = vector.broadcast %155 : vector<1x64xi32> to vector<8x64xi32>
    %157 = arith.cmpi eq, %1, %156 : vector<8x64xi32>
    %158 = arith.extui %157 : vector<8x64xi1> to vector<8x64xi32>
    %159 = arith.sitofp %158 : vector<8x64xi32> to vector<8x64xf32>
    %cst_65 = arith.constant dense<0.000000e+00> : vector<32x64xf32>
    %160 = tpu.matmul %125, %159, %cst_65 {dimension_numbers = #tpu.dot_dimension_numbers<[0], [0], [1], [1], [0, 1, 1, 1], [], []>} : vector<8x32xf32>, vector<8x64xf32>, vector<32x64xf32> -> vector<32x64xf32>
    %161 = arith.subf %103, %160 : vector<32x64xf32>
    %162 = arith.mulf %161, %161 : vector<32x64xf32>
    %cst_66 = arith.constant dense<0.000000e+00> : vector<64xf32>
    %163 = vector.multi_reduction <add>, %162, %cst_66 [0] : vector<32x64xf32> to vector<64xf32>
    %164 = vector.shape_cast %163 : vector<64xf32> to vector<1x64xf32>
    %cst_67 = arith.constant dense<0.000000e+00> : vector<1xf32>
    %165 = vector.multi_reduction <add>, %164, %cst_67 [1] : vector<1x64xf32> to vector<1xf32>
    %166 = vector.shape_cast %165 : vector<1xf32> to vector<1x1xf32>
    %167 = arith.addf %76, %166 : vector<1x1xf32>
    %cst_68 = arith.constant dense<0.000000e+00> : vector<8x8xf32>
    %168 = tpu.matmul %125, %125, %cst_68 {dimension_numbers = #tpu.dot_dimension_numbers<[1], [1], [0], [0], [0, 0, 1, 0], [], []>} : vector<8x32xf32>, vector<8x32xf32>, vector<8x8xf32> -> vector<8x8xf32>
    %169 = arith.mulf %125, %125 : vector<8x32xf32>
    %cst_69 = arith.constant dense<0.000000e+00> : vector<8xf32>
    %170 = vector.multi_reduction <add>, %169, %cst_69 [1] : vector<8x32xf32> to vector<8xf32>
    %171 = vector.shape_cast %170 : vector<8xf32> to vector<8x1xf32>
    %cst_70 = arith.constant dense<0.000000e+00> : vector<1x8xf32>
    %172 = tpu.matmul %5, %169, %cst_70 {dimension_numbers = #tpu.dot_dimension_numbers<[1], [1], [0], [0], [0, 0, 1, 0], [], []>} : vector<1x32xf32>, vector<8x32xf32>, vector<1x8xf32> -> vector<1x8xf32>
    %173 = vector.broadcast %171 : vector<8x1xf32> to vector<8x8xf32>
    %174 = vector.broadcast %172 : vector<1x8xf32> to vector<8x8xf32>
    %175 = arith.addf %173, %174 : vector<8x8xf32>
    %cst_71 = arith.constant 2.000000e+00 : f32
    %176 = vector.broadcast %cst_71 : f32 to vector<8x8xf32>
    %177 = arith.mulf %176, %168 : vector<8x8xf32>
    %178 = arith.subf %175, %177 : vector<8x8xf32>
    %cst_72 = arith.constant 1.000000e+00 : f32
    %179 = vector.broadcast %cst_72 : f32 to vector<8x8xf32>
    %180 = arith.subf %179, %178 : vector<8x8xf32>
    %cst_73 = arith.constant 0.000000e+00 : f32
    %181 = vector.broadcast %cst_73 : f32 to vector<8x8xf32>
    %182 = arith.cmpf ogt, %180, %181 : vector<8x8xf32>
    %183 = arith.andi %182, %4 : vector<8x8xi1>
    %cst_74 = arith.constant 0.000000e+00 : f32
    %184 = vector.broadcast %cst_74 : f32 to vector<8x8xf32>
    %185 = arith.select %183, %180, %184 : vector<8x8xi1>, vector<8x8xf32>
    %cst_75 = arith.constant dense<0.000000e+00> : vector<8xf32>
    %186 = vector.multi_reduction <add>, %185, %cst_75 [0] : vector<8x8xf32> to vector<8xf32>
    %187 = vector.shape_cast %186 : vector<8xf32> to vector<1x8xf32>
    %cst_76 = arith.constant dense<0.000000e+00> : vector<1xf32>
    %188 = vector.multi_reduction <add>, %187, %cst_76 [1] : vector<1x8xf32> to vector<1xf32>
    %189 = vector.shape_cast %188 : vector<1xf32> to vector<1x1xf32>
    %190 = arith.addf %99, %189 : vector<1x1xf32>
    %191 = arith.subf %125, %34 : vector<8x32xf32>
    %192 = arith.mulf %191, %191 : vector<8x32xf32>
    %cst_77 = arith.constant dense<0.000000e+00> : vector<32xf32>
    %193 = vector.multi_reduction <add>, %192, %cst_77 [0] : vector<8x32xf32> to vector<32xf32>
    %194 = vector.shape_cast %193 : vector<32xf32> to vector<1x32xf32>
    %cst_78 = arith.constant dense<0.000000e+00> : vector<1xf32>
    %195 = vector.multi_reduction <add>, %194, %cst_78 [1] : vector<1x32xf32> to vector<1xf32>
    %196 = vector.shape_cast %195 : vector<1xf32> to vector<1x1xf32>
    %197 = arith.addf %8, %196 : vector<1x1xf32>
    %cst_79 = arith.constant 2.44140625E-4 : f32
    %198 = vector.broadcast %cst_79 : f32 to vector<1x1xf32>
    %199 = arith.mulf %167, %198 : vector<1x1xf32>
    %cst_80 = arith.constant 0.0178571437 : f32
    %200 = vector.broadcast %cst_80 : f32 to vector<1x1xf32>
    %201 = arith.mulf %190, %200 : vector<1x1xf32>
    %cst_81 = arith.constant 1.250000e-01 : f32
    %202 = vector.broadcast %cst_81 : f32 to vector<1x1xf32>
    %203 = arith.mulf %197, %202 : vector<1x1xf32>
    %c0_82 = arith.constant 0 : index
    %c0_83 = arith.constant 0 : index
    %204 = vector.load %arg5[%c0_82, %c0_83] : memref<1x3xf32, #tpu.memory_space<vmem>>, vector<1x1xf32>
    tpu.vector_store %arg5[%c0_82, %c0_83], %199 {strides = array<i32>} : memref<1x3xf32, #tpu.memory_space<vmem>>, vector<1x1xf32>,
    %c0_84 = arith.constant 0 : index
    %c1_85 = arith.constant 1 : index
    %205 = vector.load %arg5[%c0_84, %c1_85] : memref<1x3xf32, #tpu.memory_space<vmem>>, vector<1x1xf32>
    tpu.vector_store %arg5[%c0_84, %c1_85], %203 {strides = array<i32>} : memref<1x3xf32, #tpu.memory_space<vmem>>, vector<1x1xf32>,
    %c0_86 = arith.constant 0 : index
    %c2 = arith.constant 2 : index
    %206 = vector.load %arg5[%c0_86, %c2] : memref<1x3xf32, #tpu.memory_space<vmem>>, vector<1x1xf32>
    tpu.vector_store %arg5[%c0_86, %c2], %201 {strides = array<i32>} : memref<1x3xf32, #tpu.memory_space<vmem>>, vector<1x1xf32>,
    return
  }
}

</mosaic_0001>

<llo_original>
// kernel: meta_prototype_forward.1
$region0: #{meta_prototype_forward.1}
  #allocation0 [shape = 'u32[]', space=smem, size = 0x4, offset = 0x4, fixed_abs, tag = 'smem constant byte address 0x4 - core index']
  #allocation1 [shape = 'u32[144,128]{1,0:T(1,128)}', space=vmem, size = 0x12000, scoped, tag = 'internal scratch']
  %s0 = inlined_call_operand.vmem [shape: f32[2,32,64], index: 0, kind: input, shape index: {}]
  %s1 = inlined_call_operand.vmem [shape: f32[2,32,64], index: 1, kind: input, shape index: {}]
  %s2 = inlined_call_operand.vmem [shape: f32[8,32], index: 2, kind: input, shape index: {}]
  %s3 = inlined_call_operand.vmem [shape: f32[32,128], index: 3, kind: output, shape index: {0}]
  %s4 = inlined_call_operand.hbm [shape: f32[2,8,32], index: 4, kind: output, shape index: {1}]
  %s5 = inlined_call_operand.vmem [shape: f32[1,3], index: 5, kind: output, shape index: {2}]
  %6 = xla_tuple %s3, %s4, %s5
  %s7 = sld [smem:[#allocation0]]
  $region38: #{meta_prototype_forward.1} parent=0
    _
  %s9 = ssub.s32 1, %s7
  %s10 = scalar_select 0, %s9, %s7
  $region1: #{meta_prototype_forward.1} parent=0
    #allocation2 [shape = 'u8[8192]{0}', space=vmem, size = 0x2000, scoped, tag = 'output window, operand 1, single buffered']
    #allocation3 [shape = 's32[1]{0}', space=sflag, size = 0x4, scoped, tag = 'scoped memory for meta_prototype_forward.1']
    %11 = vsyncpa [#allocation3], 0
    // Predicated region
    $region2: #{meta_prototype_forward.1} parent=1 // pred_check
      _
    $region3: #{meta_prototype_forward.1} parent=1 // pred_check_branch
      %13 = sbr.rel (0) target = $region5
    $region4: #{meta_prototype_forward.1} parent=1 // pred_region
      _
    $region5: #{meta_prototype_forward.1} parent=1 // pred_fallthru
      _
    // Predicated region
    $region6: #{meta_prototype_forward.1} parent=1 // pred_check
      _
    $region7: #{meta_prototype_forward.1} parent=1 // pred_check_branch
      %15 = sbr.rel (0) target = $region9
    $region8: #{meta_prototype_forward.1} parent=1 // pred_region
      _
    $region9: #{meta_prototype_forward.1} parent=1 // pred_fallthru
      _
    // Predicated region
    $region10: #{meta_prototype_forward.1} parent=1 // pred_check
      _
    $region11: #{meta_prototype_forward.1} parent=1 // pred_check_branch
      %17 = sbr.rel (0) target = $region13
    $region12: #{meta_prototype_forward.1} parent=1 // pred_region
      _
    $region13: #{meta_prototype_forward.1} parent=1 // pred_fallthru
      _
    %v18 = vld [vmem:[%s2] sm:$0xff]
    %v19 = vlaneseq
    %v20 = vshrl.u32 %v19, 7
    %v21 = vlaneseq
    %v22 = vand.u32 %v21, 127
    %vm23 = vcmp.gt.s32.totalorder %v22, %v20
    %v24 = vld [vmem:[%s0] sm:$0xff]
    %v25 = vld [vmem:[%s0 + $0x8] sm:$0xff]
    %v26 = vld [vmem:[%s0 + $0x10] sm:$0xff]
    %v27 = vld [vmem:[%s0 + $0x18] sm:$0xff]
    %v28 = vld [vmem:[%s1] sm:$0xff]
    %v29 = vld [vmem:[%s1 + $0x8] sm:$0xff]
    %v30 = vld [vmem:[%s1 + $0x10] sm:$0xff]
    %v31 = vld [vmem:[%s1 + $0x18] sm:$0xff]
    %vm32 = vcmask 261120
    %v34 = vsel %vm32, %v18, 0
    %36 = vmatprep.subr.mxu0 0.0
    %37 = vmatpush1.msra.mxu0 %v24
    %38 = vmatprep.subr.mxu0 0.0
    %39 = vmatpush1.msra.mxu0 %v25
    %40 = vmatprep.subr.mxu0 0.0
    %41 = vmatpush1.msra.mxu0 %v26
    %42 = vmatprep.subr.mxu0 0.0
    %43 = vmatpush1.msra.mxu0 %v27
    %44 = vmatprep.subr.mxu0 0.0
    %45 = vmatpush1.msra.mxu0 0.0
    %46 = vmatprep.subr.mxu0 0.0
    %47 = vmatpush1.msra.mxu0 0.0
    %48 = vmatprep.subr.mxu0 0.0
    %49 = vmatpush1.msra.mxu0 0.0
    %50 = vmatprep.subr.mxu0 0.0
    %51 = vmatpush1.msra.mxu0 0.0
    %52 = vmatprep.subr.mxu0 0.0
    %53 = vmatpush1.msra.mxu0 0.0
    %54 = vmatprep.subr.mxu0 0.0
    %55 = vmatpush1.msra.mxu0 0.0
    %56 = vmatprep.subr.mxu0 0.0
    %57 = vmatpush1.msra.mxu0 0.0
    %58 = vmatprep.subr.mxu0 0.0
    %59 = vmatpush1.msra.mxu0 0.0
    %60 = vmatprep.subr.mxu0 0.0
    %61 = vmatpush1.msra.mxu0 0.0
    %62 = vmatprep.subr.mxu0 0.0
    %63 = vmatpush1.msra.mxu0 0.0
    %64 = vmatprep.subr.mxu0 0.0
    %65 = vmatpush1.msra.mxu0 0.0
    %66 = vmatprep.subr.mxu0 0.0
    %67 = vmatpush1.msra.mxu0 0.0
    %68 = vmatprep.subr.mxu0 0.0
    %69 = vmatpush1.msra.mxu0 0.0
    %70 = vmatprep.subr.mxu0 0.0
    %71 = vmatpush1.msra.mxu0 0.0
    %72 = vmatprep.subr.mxu0 0.0
    %73 = vmatpush1.msra.mxu0 0.0
    %74 = vmatprep.subr.mxu0 0.0
    %75 = vmatpush1.msra.mxu0 0.0
    %76 = vmatprep.subr.mxu0 0.0
    %77 = vmatpush1.msra.mxu0 0.0
    %78 = vmatprep.subr.mxu0 0.0
    %79 = vmatpush1.msra.mxu0 0.0
    %80 = vmatprep.subr.mxu0 0.0
    %81 = vmatpush1.msra.mxu0 0.0
    %82 = vmatprep.subr.mxu0 0.0
    %83 = vmatpush1.msra.mxu0 0.0
    %84 = vmatprep.subr.mxu0 0.0
    %85 = vmatpush1.msra.mxu0 0.0
    %86 = vmatprep.subr.mxu0 0.0
    %87 = vmatpush1.msra.mxu0 0.0
    %88 = vmatprep.subr.mxu0 0.0
    %89 = vmatpush1.msra.mxu0 0.0
    %90 = vmatprep.subr.mxu0 0.0
    %91 = vmatpush1.msra.mxu0 0.0
    %92 = vmatprep.subr.mxu0 0.0
    %93 = vmatpush1.msra.mxu0 0.0
    %94 = vmatprep.subr.mxu0 0.0
    %95 = vmatpush1.msra.mxu0 0.0
    %96 = vmatprep.subr.mxu0 0.0
    %97 = vmatpush1.msra.mxu0 0.0
    %98 = vmatprep.subr.mxu0 0.0
    %99 = vmatpush1.msra.mxu0 0.0
    %100 = vmatprep.mubr.f32.mxu0 0.0
    %101 = vmatmul.mubr.f32.gmra.mrb[0].mxu0 %v34
    %v102 = vpop.f32.mrb[0].mxu0
    %v103 = vadd.f32 0.0, %v102
    %v104 = vpop.f32.mrb[0].mxu0
    %105 = vdwg.mxu0
    %vm106 = vcmask 523264
    %v107 = vsel %vm106, %v103, -inf
    %108 = vmax.xlane.f32.xlu0 %v107
    %v109 = vpop.xlane.xlu0 %108
    %v110 = vsub.f32 %v103, %v109
    %v111 = vmul.f32 %v110, 1.442695
    %v112 = vpow.pop %v111
    %v113 = vsel %vm106, %v112, 0.0
    %114 = vadd.xlane.f32.xlu0 %v113
    %v115 = vpop.xlane.xlu0 %114
    %v116 = vrcp.pop %v115
    %v117 = vmul.f32 %v112, %v116
    %v119 = vsel %vm106, %v117, 0
    %v122 = vsel %vm106, %v24, 0
    %v125 = vsel %vm106, %v25, 0
    %v128 = vsel %vm106, %v26, 0
    %v131 = vsel %vm106, %v27, 0
    %133 = vmatprep.subr.mxu0 0.0
    %134 = vmatpush1.xpose.msra.mxu0 %v122
    %135 = vmatprep.subr.mxu0 0.0
    %136 = vmatpush1.xpose.msra.mxu0 %v125
    %137 = vmatprep.subr.mxu0 0.0
    %138 = vmatpush1.xpose.msra.mxu0 %v128
    %139 = vmatprep.subr.mxu0 0.0
    %140 = vmatpush1.xpose.msra.mxu0 %v131
    %141 = vmatprep.subr.mxu0 0.0
    %142 = vmatpush1.xpose.msra.mxu0 0.0
    %143 = vmatprep.subr.mxu0 0.0
    %144 = vmatpush1.xpose.msra.mxu0 0.0
    %145 = vmatprep.subr.mxu0 0.0
    %146 = vmatpush1.xpose.msra.mxu0 0.0
    %147 = vmatprep.subr.mxu0 0.0
    %148 = vmatpush1.xpose.msra.mxu0 0.0
    %149 = vmatprep.subr.mxu0 0.0
    %150 = vmatpush1.xpose.msra.mxu0 0.0
    %151 = vmatprep.subr.mxu0 0.0
    %152 = vmatpush1.xpose.msra.mxu0 0.0
    %153 = vmatprep.subr.mxu0 0.0
    %154 = vmatpush1.xpose.msra.mxu0 0.0
    %155 = vmatprep.subr.mxu0 0.0
    %156 = vmatpush1.xpose.msra.mxu0 0.0
    %157 = vmatprep.subr.mxu0 0.0
    %158 = vmatpush1.xpose.msra.mxu0 0.0
    %159 = vmatprep.subr.mxu0 0.0
    %160 = vmatpush1.xpose.msra.mxu0 0.0
    %161 = vmatprep.subr.mxu0 0.0
    %162 = vmatpush1.xpose.msra.mxu0 0.0
    %163 = vmatprep.subr.mxu0 0.0
    %164 = vmatpush1.xpose.msra.mxu0 0.0
    %165 = vmatprep.subr.mxu0 0.0
    %166 = vmatpush1.xpose.msra.mxu0 0.0
    %167 = vmatprep.subr.mxu0 0.0
    %168 = vmatpush1.xpose.msra.mxu0 0.0
    %169 = vmatprep.subr.mxu0 0.0
    %170 = vmatpush1.xpose.msra.mxu0 0.0
    %171 = vmatprep.subr.mxu0 0.0
    %172 = vmatpush1.xpose.msra.mxu0 0.0
    %173 = vmatprep.subr.mxu0 0.0
    %174 = vmatpush1.xpose.msra.mxu0 0.0
    %175 = vmatprep.subr.mxu0 0.0
    %176 = vmatpush1.xpose.msra.mxu0 0.0
    %177 = vmatprep.subr.mxu0 0.0
    %178 = vmatpush1.xpose.msra.mxu0 0.0
    %179 = vmatprep.subr.mxu0 0.0
    %180 = vmatpush1.xpose.msra.mxu0 0.0
    %181 = vmatprep.subr.mxu0 0.0
    %182 = vmatpush1.xpose.msra.mxu0 0.0
    %183 = vmatprep.subr.mxu0 0.0
    %184 = vmatpush1.xpose.msra.mxu0 0.0
    %185 = vmatprep.subr.mxu0 0.0
    %186 = vmatpush1.xpose.msra.mxu0 0.0
    %187 = vmatprep.subr.mxu0 0.0
    %188 = vmatpush1.xpose.msra.mxu0 0.0
    %189 = vmatprep.subr.mxu0 0.0
    %190 = vmatpush1.xpose.msra.mxu0 0.0
    %191 = vmatprep.subr.mxu0 0.0
    %192 = vmatpush1.xpose.msra.mxu0 0.0
    %193 = vmatprep.subr.mxu0 0.0
    %194 = vmatpush1.xpose.msra.mxu0 0.0
    %195 = vmatprep.subr.mxu0 0.0
    %196 = vmatpush1.xpose.msra.mxu0 0.0
    %197 = vmatprep.mubr.f32.mxu0 0.0
    %198 = vmatmul.mubr.f32.gmra.mrb[0].mxu0 %v119
    %v199 = vpop.f32.mrb[0].mxu0
    %v200 = vadd.f32 0.0, %v199
    %v201 = vpop.f32.mrb[0].mxu0
    %202 = vdwg.mxu0
    %203 = vst.msk [vmem:[#allocation2] sm:$0xff] %vm32, %v200
    %v204 = vmul.f32 %v200, %v200
    %v205 = vsel %vm32, %v204, 0.0
    %206 = vadd.xlane.f32.xlu0 %v205
    %v207 = vpop.xlane.xlu0 %206
    %v208 = vmax.f32 %v207, 1e-24
    %v209 = vrsqrt.pop %v208
    %v210 = vmul.f32 %v200, %v209
    %v212 = vsel %vm32, %v210, 0
    %214 = vmatprep.subr.mxu0 0.0
    %215 = vmatpush1.msra.mxu0 %v28
    %216 = vmatprep.subr.mxu0 0.0
    %217 = vmatpush1.msra.mxu0 %v29
    %218 = vmatprep.subr.mxu0 0.0
    %219 = vmatpush1.msra.mxu0 %v30
    %220 = vmatprep.subr.mxu0 0.0
    %221 = vmatpush1.msra.mxu0 %v31
    %222 = vmatprep.subr.mxu0 0.0
    %223 = vmatpush1.msra.mxu0 0.0
    %224 = vmatprep.subr.mxu0 0.0
    %225 = vmatpush1.msra.mxu0 0.0
    %226 = vmatprep.subr.mxu0 0.0
    %227 = vmatpush1.msra.mxu0 0.0
    %228 = vmatprep.subr.mxu0 0.0
    %229 = vmatpush1.msra.mxu0 0.0
    %230 = vmatprep.subr.mxu0 0.0
    %231 = vmatpush1.msra.mxu0 0.0
    %232 = vmatprep.subr.mxu0 0.0
    %233 = vmatpush1.msra.mxu0 0.0
    %234 = vmatprep.subr.mxu0 0.0
    %235 = vmatpush1.msra.mxu0 0.0
    %236 = vmatprep.subr.mxu0 0.0
    %237 = vmatpush1.msra.mxu0 0.0
    %238 = vmatprep.subr.mxu0 0.0
    %239 = vmatpush1.msra.mxu0 0.0
    %240 = vmatprep.subr.mxu0 0.0
    %241 = vmatpush1.msra.mxu0 0.0
    %242 = vmatprep.subr.mxu0 0.0
    %243 = vmatpush1.msra.mxu0 0.0
    %244 = vmatprep.subr.mxu0 0.0
    %245 = vmatpush1.msra.mxu0 0.0
    %246 = vmatprep.subr.mxu0 0.0
    %247 = vmatpush1.msra.mxu0 0.0
    %248 = vmatprep.subr.mxu0 0.0
    %249 = vmatpush1.msra.mxu0 0.0
    %250 = vmatprep.subr.mxu0 0.0
    %251 = vmatpush1.msra.mxu0 0.0
    %252 = vmatprep.subr.mxu0 0.0
    %253 = vmatpush1.msra.mxu0 0.0
    %254 = vmatprep.subr.mxu0 0.0
    %255 = vmatpush1.msra.mxu0 0.0
    %256 = vmatprep.subr.mxu0 0.0
    %257 = vmatpush1.msra.mxu0 0.0
    %258 = vmatprep.subr.mxu0 0.0
    %259 = vmatpush1.msra.mxu0 0.0
    %260 = vmatprep.subr.mxu0 0.0
    %261 = vmatpush1.msra.mxu0 0.0
    %262 = vmatprep.subr.mxu0 0.0
    %263 = vmatpush1.msra.mxu0 0.0
    %264 = vmatprep.subr.mxu0 0.0
    %265 = vmatpush1.msra.mxu0 0.0
    %266 = vmatprep.subr.mxu0 0.0
    %267 = vmatpush1.msra.mxu0 0.0
    %268 = vmatprep.subr.mxu0 0.0
    %269 = vmatpush1.msra.mxu0 0.0
    %270 = vmatprep.subr.mxu0 0.0
    %271 = vmatpush1.msra.mxu0 0.0
    %272 = vmatprep.subr.mxu0 0.0
    %273 = vmatpush1.msra.mxu0 0.0
    %274 = vmatprep.subr.mxu0 0.0
    %275 = vmatpush1.msra.mxu0 0.0
    %276 = vmatprep.subr.mxu0 0.0
    %277 = vmatpush1.msra.mxu0 0.0
    %278 = vmatprep.mubr.f32.mxu0 0.0
    %279 = vmatmul.mubr.f32.gmra.mrb[0].mxu0 %v212
    %v280 = vpop.f32.mrb[0].mxu0
    %v281 = vadd.f32 0.0, %v280
    %v282 = vpop.f32.mrb[0].mxu0
    %283 = vdwg.mxu0
    %v284 = vsel %vm106, %v281, -inf
    %v285 = vrot.slane %v284, 4
    %v286 = vmax.f32 %v284, %v285
    %v287 = vrot.slane %v286, 2
    %v288 = vmax.f32 %v286, %v287
    %v289 = vrot.slane %v288, 1
    %v290 = vmax.f32 %v288, %v289
    %v291 = vsub.f32 %v281, %v290
    %v292 = vmul.f32 %v291, 1.442695
    %v293 = vpow.pop %v292
    %v294 = vsel %vm106, %v293, 0.0
    %v295 = vrot.slane %v294, 4
    %v296 = vadd.f32 %v294, %v295
    %v297 = vrot.slane %v296, 2
    %v298 = vadd.f32 %v296, %v297
    %v299 = vrot.slane %v298, 1
    %v300 = vadd.f32 %v298, %v299
    %v301 = vrcp.pop %v300
    %v302 = vmul.f32 %v293, %v301
    %303 = vxpose.xlu0.b32.start [1/16] %v210, 128
    %304 = vxpose.xlu0.b32.cont [2/16] 0.0, 128
    %305 = vxpose.xlu0.b32.cont [3/16] 0.0, 128
    %306 = vxpose.xlu0.b32.cont [4/16] 0.0, 128
    %307 = vxpose.xlu0.b32.cont [5/16] 0.0, 128
    %308 = vxpose.xlu0.b32.cont [6/16] 0.0, 128
    %309 = vxpose.xlu0.b32.cont [7/16] 0.0, 128
    %310 = vxpose.xlu0.b32.cont [8/16] 0.0, 128
    %311 = vxpose.xlu0.b32.cont [9/16] 0.0, 128
    %312 = vxpose.xlu0.b32.cont [10/16] 0.0, 128
    %313 = vxpose.xlu0.b32.cont [11/16] 0.0, 128
    %314 = vxpose.xlu0.b32.cont [12/16] 0.0, 128
    %315 = vxpose.xlu0.b32.cont [13/16] 0.0, 128
    %316 = vxpose.xlu0.b32.cont [14/16] 0.0, 128
    %317 = vxpose.xlu0.b32.cont [15/16] 0.0, 128
    %318 = vxpose.xlu0.b32.end [16/16] 0.0, 128
    %v319 = vpop.trf.xlu0
    %v320 = vpop.trf.xlu0
    %v321 = vpop.trf.xlu0
    %v322 = vpop.trf.xlu0
    %v323 = vpop.trf.xlu0
    %v324 = vpop.trf.xlu0
    %v325 = vpop.trf.xlu0
    %v326 = vpop.trf.xlu0
    %v327 = vpop.trf.xlu0
    %v328 = vpop.trf.xlu0
    %v329 = vpop.trf.xlu0
    %v330 = vpop.trf.xlu0
    %v331 = vpop.trf.xlu0
    %v332 = vpop.trf.xlu0
    %v333 = vpop.trf.xlu0
    %v334 = vpop.trf.xlu0
    %vm335 = vcmask 64512
    %v337 = vsel %vm335, %v319, 0
    %v340 = vsel %vm335, %v320, 0
    %v343 = vsel %vm335, %v321, 0
    %v346 = vsel %vm335, %v322, 0
    %348 = vmatprep.subr.mxu0 0.0
    %349 = vmatpush1.msra.mxu0 %v302
    %350 = vmatprep.subr.mxu0 0.0
    %351 = vmatpush1.msra.mxu0 0.0
    %352 = vmatprep.subr.mxu0 0.0
    %353 = vmatpush1.msra.mxu0 0.0
    %354 = vmatprep.subr.mxu0 0.0
    %355 = vmatpush1.msra.mxu0 0.0
    %356 = vmatprep.subr.mxu0 0.0
    %357 = vmatpush1.msra.mxu0 0.0
    %358 = vmatprep.subr.mxu0 0.0
    %359 = vmatpush1.msra.mxu0 0.0
    %360 = vmatprep.subr.mxu0 0.0
    %361 = vmatpush1.msra.mxu0 0.0
    %362 = vmatprep.subr.mxu0 0.0
    %363 = vmatpush1.msra.mxu0 0.0
    %364 = vmatprep.subr.mxu0 0.0
    %365 = vmatpush1.msra.mxu0 0.0
    %366 = vmatprep.subr.mxu0 0.0
    %367 = vmatpush1.msra.mxu0 0.0
    %368 = vmatprep.subr.mxu0 0.0
    %369 = vmatpush1.msra.mxu0 0.0
    %370 = vmatprep.subr.mxu0 0.0
    %371 = vmatpush1.msra.mxu0 0.0
    %372 = vmatprep.subr.mxu0 0.0
    %373 = vmatpush1.msra.mxu0 0.0
    %374 = vmatprep.subr.mxu0 0.0
    %375 = vmatpush1.msra.mxu0 0.0
    %376 = vmatprep.subr.mxu0 0.0
    %377 = vmatpush1.msra.mxu0 0.0
    %378 = vmatprep.subr.mxu0 0.0
    %379 = vmatpush1.msra.mxu0 0.0
    %380 = vmatprep.subr.mxu0 0.0
    %381 = vmatpush1.msra.mxu0 0.0
    %382 = vmatprep.subr.mxu0 0.0
    %383 = vmatpush1.msra.mxu0 0.0
    %384 = vmatprep.subr.mxu0 0.0
    %385 = vmatpush1.msra.mxu0 0.0
    %386 = vmatprep.subr.mxu0 0.0
    %387 = vmatpush1.msra.mxu0 0.0
    %388 = vmatprep.subr.mxu0 0.0
    %389 = vmatpush1.msra.mxu0 0.0
    %390 = vmatprep.subr.mxu0 0.0
    %391 = vmatpush1.msra.mxu0 0.0
    %392 = vmatprep.subr.mxu0 0.0
    %393 = vmatpush1.msra.mxu0 0.0
    %394 = vmatprep.subr.mxu0 0.0
    %395 = vmatpush1.msra.mxu0 0.0
    %396 = vmatprep.subr.mxu0 0.0
    %397 = vmatpush1.msra.mxu0 0.0
    %398 = vmatprep.subr.mxu0 0.0
    %399 = vmatpush1.msra.mxu0 0.0
    %400 = vmatprep.subr.mxu0 0.0
    %401 = vmatpush1.msra.mxu0 0.0
    %402 = vmatprep.subr.mxu0 0.0
    %403 = vmatpush1.msra.mxu0 0.0
    %404 = vmatprep.subr.mxu0 0.0
    %405 = vmatpush1.msra.mxu0 0.0
    %406 = vmatprep.subr.mxu0 0.0
    %407 = vmatpush1.msra.mxu0 0.0
    %408 = vmatprep.subr.mxu0 0.0
    %409 = vmatpush1.msra.mxu0 0.0
    %410 = vmatprep.subr.mxu0 0.0
    %411 = vmatpush1.msra.mxu0 0.0
    %412 = vmatprep.mubr.f32.mxu0 0.0
    %413 = vmatmul.mubr.f32.gmra.mrb[0].mxu0 %v337
    %v414 = vpop.f32.mrb[0].mxu0
    %v415 = vadd.f32 0.0, %v414
    %v416 = vpop.f32.mrb[0].mxu0
    %417 = vmatprep.mubr.f32.mxu0 0.0
    %418 = vmatmul.mubr.f32.gmra.mrb[0].mxu0 %v340
    %v419 = vpop.f32.mrb[0].mxu0
    %v420 = vadd.f32 0.0, %v419
    %v421 = vpop.f32.mrb[0].mxu0
    %422 = vmatprep.mubr.f32.mxu0 0.0
    %423 = vmatmul.mubr.f32.gmra.mrb[0].mxu0 %v343
    %v424 = vpop.f32.mrb[0].mxu0
    %v425 = vadd.f32 0.0, %v424
    %v426 = vpop.f32.mrb[0].mxu0
    %427 = vmatprep.mubr.f32.mxu0 0.0
    %428 = vmatmul.mubr.f32.gmra.mrb[0].mxu0 %v346
    %v429 = vpop.f32.mrb[0].mxu0
    %v430 = vadd.f32 0.0, %v429
    %v431 = vpop.f32.mrb[0].mxu0
    %432 = vdwg.mxu0
    %v433 = vmul.f32 %v415, %v415
    %v434 = vmul.f32 %v420, %v420
    %v435 = vmul.f32 %v425, %v425
    %v436 = vmul.f32 %v430, %v430
    %v437 = vsel %vm106, %v433, 0.0
    %v438 = vsel %vm106, %v434, 0.0
    %v439 = vadd.f32 %v437, %v438
    %v440 = vsel %vm106, %v435, 0.0
    %v441 = vadd.f32 %v439, %v440
    %v442 = vsel %vm106, %v436, 0.0
    %v443 = vadd.f32 %v441, %v442
    %v444 = vrot.slane %v443, 4
    %v445 = vadd.f32 %v443, %v444
    %v446 = vrot.slane %v445, 2
    %v447 = vadd.f32 %v445, %v446
    %v448 = vrot.slane %v447, 1
    %v449 = vadd.f32 %v447, %v448
    %v450 = vmax.f32 %v449, 1e-24
    %v451 = vrsqrt.pop %v450
    %v452 = vmul.f32 %v415, %v451
    %v453 = vmul.f32 %v420, %v451
    %v454 = vmul.f32 %v425, %v451
    %v455 = vmul.f32 %v430, %v451
    %v456 = vadd.f32 %v452, %v28
    %v457 = vadd.f32 %v453, %v29
    %v458 = vadd.f32 %v454, %v30
    %v459 = vadd.f32 %v455, %v31
    %460 = vst.msk [vmem:[%s3] sm:$0xff] %vm106, %v456
    %461 = vst.msk [vmem:[%s3 + $0x8] sm:$0xff] %vm106, %v457
    %462 = vst.msk [vmem:[%s3 + $0x10] sm:$0xff] %vm106, %v458
    %463 = vst.msk [vmem:[%s3 + $0x18] sm:$0xff] %vm106, %v459
    %v464 = vsel %vm106, %v302, -inf
    %v465 = vrot.slane %v464, 4
    %v466 = vmax.f32 %v464, %v465
    %v467 = vrot.slane %v466, 2
    %v468 = vmax.f32 %v466, %v467
    %v469 = vrot.slane %v468, 1
    %v470 = vmax.f32 %v468, %v469
    %vm471 = vcmp.eq.f32.partialorder %v302, %v470
    %v472 = vsel %vm471, %v20, 8
    %v473 = vsel %vm106, %v472, 2147483647
    %v474 = vrot.slane %v473, 4
    %vm475 = vcmp.lt.s32.totalorder %v473, %v474
    %v476 = vsel %vm475, %v473, %v474
    %v477 = vrot.slane %v476, 2
    %vm478 = vcmp.lt.s32.totalorder %v476, %v477
    %v479 = vsel %vm478, %v476, %v477
    %v480 = vrot.slane %v479, 1
    %vm481 = vcmp.lt.s32.totalorder %v479, %v480
    %v482 = vsel %vm481, %v479, %v480
    %vm483 = vcmp.eq.s32.totalorder %v20, %v482
    %v484 = vsel %vm483, 1, 0
    %v485 = vcvt.s32.f32 %v484
    %486 = vmatprep.subr.mxu0 0.0
    %487 = vmatpush1.msra.mxu0 %v485
    %488 = vmatprep.subr.mxu0 0.0
    %489 = vmatpush1.msra.mxu0 0.0
    %490 = vmatprep.subr.mxu0 0.0
    %491 = vmatpush1.msra.mxu0 0.0
    %492 = vmatprep.subr.mxu0 0.0
    %493 = vmatpush1.msra.mxu0 0.0
    %494 = vmatprep.subr.mxu0 0.0
    %495 = vmatpush1.msra.mxu0 0.0
    %496 = vmatprep.subr.mxu0 0.0
    %497 = vmatpush1.msra.mxu0 0.0
    %498 = vmatprep.subr.mxu0 0.0
    %499 = vmatpush1.msra.mxu0 0.0
    %500 = vmatprep.subr.mxu0 0.0
    %501 = vmatpush1.msra.mxu0 0.0
    %502 = vmatprep.subr.mxu0 0.0
    %503 = vmatpush1.msra.mxu0 0.0
    %504 = vmatprep.subr.mxu0 0.0
    %505 = vmatpush1.msra.mxu0 0.0
    %506 = vmatprep.subr.mxu0 0.0
    %507 = vmatpush1.msra.mxu0 0.0
    %508 = vmatprep.subr.mxu0 0.0
    %509 = vmatpush1.msra.mxu0 0.0
    %510 = vmatprep.subr.mxu0 0.0
    %511 = vmatpush1.msra.mxu0 0.0
    %512 = vmatprep.subr.mxu0 0.0
    %513 = vmatpush1.msra.mxu0 0.0
    %514 = vmatprep.subr.mxu0 0.0
    %515 = vmatpush1.msra.mxu0 0.0
    %516 = vmatprep.subr.mxu0 0.0
    %517 = vmatpush1.msra.mxu0 0.0
    %518 = vmatprep.subr.mxu0 0.0
    %519 = vmatpush1.msra.mxu0 0.0
    %520 = vmatprep.subr.mxu0 0.0
    %521 = vmatpush1.msra.mxu0 0.0
    %522 = vmatprep.subr.mxu0 0.0
    %523 = vmatpush1.msra.mxu0 0.0
    %524 = vmatprep.subr.mxu0 0.0
    %525 = vmatpush1.msra.mxu0 0.0
    %526 = vmatprep.subr.mxu0 0.0
    %527 = vmatpush1.msra.mxu0 0.0
    %528 = vmatprep.subr.mxu0 0.0
    %529 = vmatpush1.msra.mxu0 0.0
    %530 = vmatprep.subr.mxu0 0.0
    %531 = vmatpush1.msra.mxu0 0.0
    %532 = vmatprep.subr.mxu0 0.0
    %533 = vmatpush1.msra.mxu0 0.0
    %534 = vmatprep.subr.mxu0 0.0
    %535 = vmatpush1.msra.mxu0 0.0
    %536 = vmatprep.subr.mxu0 0.0
    %537 = vmatpush1.msra.mxu0 0.0
    %538 = vmatprep.subr.mxu0 0.0
    %539 = vmatpush1.msra.mxu0 0.0
    %540 = vmatprep.subr.mxu0 0.0
    %541 = vmatpush1.msra.mxu0 0.0
    %542 = vmatprep.subr.mxu0 0.0
    %543 = vmatpush1.msra.mxu0 0.0
    %544 = vmatprep.subr.mxu0 0.0
    %545 = vmatpush1.msra.mxu0 0.0
    %546 = vmatprep.subr.mxu0 0.0
    %547 = vmatpush1.msra.mxu0 0.0
    %548 = vmatprep.subr.mxu0 0.0
    %549 = vmatpush1.msra.mxu0 0.0
    %550 = vmatprep.mubr.f32.mxu0 0.0
    %551 = vmatmul.mubr.f32.gmra.mrb[0].mxu0 %v337
    %v552 = vpop.f32.mrb[0].mxu0
    %v553 = vadd.f32 0.0, %v552
    %v554 = vpop.f32.mrb[0].mxu0
    %555 = vmatprep.mubr.f32.mxu0 0.0
    %556 = vmatmul.mubr.f32.gmra.mrb[0].mxu0 %v340
    %v557 = vpop.f32.mrb[0].mxu0
    %v558 = vadd.f32 0.0, %v557
    %v559 = vpop.f32.mrb[0].mxu0
    %560 = vmatprep.mubr.f32.mxu0 0.0
    %561 = vmatmul.mubr.f32.gmra.mrb[0].mxu0 %v343
    %v562 = vpop.f32.mrb[0].mxu0
    %v563 = vadd.f32 0.0, %v562
    %v564 = vpop.f32.mrb[0].mxu0
    %565 = vmatprep.mubr.f32.mxu0 0.0
    %566 = vmatmul.mubr.f32.gmra.mrb[0].mxu0 %v346
    %v567 = vpop.f32.mrb[0].mxu0
    %v568 = vadd.f32 0.0, %v567
    %v569 = vpop.f32.mrb[0].mxu0
    %570 = vdwg.mxu0
    %v571 = vsub.f32 %v28, %v553
    %v572 = vsub.f32 %v29, %v558
    %v573 = vsub.f32 %v30, %v563
    %v574 = vsub.f32 %v31, %v568
    %v575 = vmul.f32 %v571, %v571
    %v576 = vmul.f32 %v572, %v572
    %v577 = vmul.f32 %v573, %v573
    %v578 = vmul.f32 %v574, %v574
    %v579 = vsel %vm106, %v575, 0.0
    %v580 = vsel %vm106, %v576, 0.0
    %v581 = vadd.f32 %v579, %v580
    %v582 = vsel %vm106, %v577, 0.0
    %v583 = vadd.f32 %v581, %v582
    %v584 = vsel %vm106, %v578, 0.0
    %v585 = vadd.f32 %v583, %v584
    %v586 = vrot.slane %v585, 4
    %v587 = vadd.f32 %v585, %v586
    %v588 = vrot.slane %v587, 2
    %v589 = vadd.f32 %v587, %v588
    %v590 = vrot.slane %v589, 1
    %v591 = vadd.f32 %v589, %v590
    %v592 = vsel %vm106, %v591, 0.0
    %593 = vadd.xlane.f32.xlu0 %v592
    %v594 = vpop.xlane.xlu0 %593
    %v595 = vadd.f32 %v594, 0.0
    %596 = vmatprep.subr.mxu0 0.0
    %597 = vmatpush1.xpose.msra.mxu0 %v212
    %598 = vmatprep.subr.mxu0 0.0
    %599 = vmatpush1.xpose.msra.mxu0 0.0
    %600 = vmatprep.subr.mxu0 0.0
    %601 = vmatpush1.xpose.msra.mxu0 0.0
    %602 = vmatprep.subr.mxu0 0.0
    %603 = vmatpush1.xpose.msra.mxu0 0.0
    %604 = vmatprep.subr.mxu0 0.0
    %605 = vmatpush1.xpose.msra.mxu0 0.0
    %606 = vmatprep.subr.mxu0 0.0
    %607 = vmatpush1.xpose.msra.mxu0 0.0
    %608 = vmatprep.subr.mxu0 0.0
    %609 = vmatpush1.xpose.msra.mxu0 0.0
    %610 = vmatprep.subr.mxu0 0.0
    %611 = vmatpush1.xpose.msra.mxu0 0.0
    %612 = vmatprep.subr.mxu0 0.0
    %613 = vmatpush1.xpose.msra.mxu0 0.0
    %614 = vmatprep.subr.mxu0 0.0
    %615 = vmatpush1.xpose.msra.mxu0 0.0
    %616 = vmatprep.subr.mxu0 0.0
    %617 = vmatpush1.xpose.msra.mxu0 0.0
    %618 = vmatprep.subr.mxu0 0.0
    %619 = vmatpush1.xpose.msra.mxu0 0.0
    %620 = vmatprep.subr.mxu0 0.0
    %621 = vmatpush1.xpose.msra.mxu0 0.0
    %622 = vmatprep.subr.mxu0 0.0
    %623 = vmatpush1.xpose.msra.mxu0 0.0
    %624 = vmatprep.subr.mxu0 0.0
    %625 = vmatpush1.xpose.msra.mxu0 0.0
    %626 = vmatprep.subr.mxu0 0.0
    %627 = vmatpush1.xpose.msra.mxu0 0.0
    %628 = vmatprep.subr.mxu0 0.0
    %629 = vmatpush1.xpose.msra.mxu0 0.0
    %630 = vmatprep.subr.mxu0 0.0
    %631 = vmatpush1.xpose.msra.mxu0 0.0
    %632 = vmatprep.subr.mxu0 0.0
    %633 = vmatpush1.xpose.msra.mxu0 0.0
    %634 = vmatprep.subr.mxu0 0.0
    %635 = vmatpush1.xpose.msra.mxu0 0.0
    %636 = vmatprep.subr.mxu0 0.0
    %637 = vmatpush1.xpose.msra.mxu0 0.0
    %638 = vmatprep.subr.mxu0 0.0
    %639 = vmatpush1.xpose.msra.mxu0 0.0
    %640 = vmatprep.subr.mxu0 0.0
    %641 = vmatpush1.xpose.msra.mxu0 0.0
    %642 = vmatprep.subr.mxu0 0.0
    %643 = vmatpush1.xpose.msra.mxu0 0.0
    %644 = vmatprep.subr.mxu0 0.0
    %645 = vmatpush1.xpose.msra.mxu0 0.0
    %646 = vmatprep.subr.mxu0 0.0
    %647 = vmatpush1.xpose.msra.mxu0 0.0
    %648 = vmatprep.subr.mxu0 0.0
    %649 = vmatpush1.xpose.msra.mxu0 0.0
    %650 = vmatprep.subr.mxu0 0.0
    %651 = vmatpush1.xpose.msra.mxu0 0.0
    %652 = vmatprep.subr.mxu0 0.0
    %653 = vmatpush1.xpose.msra.mxu0 0.0
    %654 = vmatprep.subr.mxu0 0.0
    %655 = vmatpush1.xpose.msra.mxu0 0.0
    %656 = vmatprep.subr.mxu0 0.0
    %657 = vmatpush1.xpose.msra.mxu0 0.0
    %658 = vmatprep.subr.mxu0 0.0
    %659 = vmatpush1.xpose.msra.mxu0 0.0
    %660 = vmatprep.mubr.f32.mxu0 0.0
    %661 = vmatmul.mubr.f32.gmra.mrb[0].mxu0 %v212
    %v662 = vpop.f32.mrb[0].mxu0
    %v663 = vadd.f32 0.0, %v662
    %v664 = vpop.f32.mrb[0].mxu0
    %665 = vdwg.mxu0
    %v666 = vmul.f32 %v210, %v210
    %v667 = vsel %vm32, %v666, 0.0
    %668 = vadd.xlane.f32.xlu0 %v667
    %v669 = vpop.xlane.xlu0 %668
    %v671 = vsel %vm32, 1.0, 0
    %v674 = vsel %vm32, %v666, 0
    %676 = vmatprep.subr.mxu0 0.0
    %677 = vmatpush1.xpose.msra.mxu0 %v674
    %678 = vmatprep.subr.mxu0 0.0
    %679 = vmatpush1.xpose.msra.mxu0 0.0
    %680 = vmatprep.subr.mxu0 0.0
    %681 = vmatpush1.xpose.msra.mxu0 0.0
    %682 = vmatprep.subr.mxu0 0.0
    %683 = vmatpush1.xpose.msra.mxu0 0.0
    %684 = vmatprep.subr.mxu0 0.0
    %685 = vmatpush1.xpose.msra.mxu0 0.0
    %686 = vmatprep.subr.mxu0 0.0
    %687 = vmatpush1.xpose.msra.mxu0 0.0
    %688 = vmatprep.subr.mxu0 0.0
    %689 = vmatpush1.xpose.msra.mxu0 0.0
    %690 = vmatprep.subr.mxu0 0.0
    %691 = vmatpush1.xpose.msra.mxu0 0.0
    %692 = vmatprep.subr.mxu0 0.0
    %693 = vmatpush1.xpose.msra.mxu0 0.0
    %694 = vmatprep.subr.mxu0 0.0
    %695 = vmatpush1.xpose.msra.mxu0 0.0
    %696 = vmatprep.subr.mxu0 0.0
    %697 = vmatpush1.xpose.msra.mxu0 0.0
    %698 = vmatprep.subr.mxu0 0.0
    %699 = vmatpush1.xpose.msra.mxu0 0.0
    %700 = vmatprep.subr.mxu0 0.0
    %701 = vmatpush1.xpose.msra.mxu0 0.0
    %702 = vmatprep.subr.mxu0 0.0
    %703 = vmatpush1.xpose.msra.mxu0 0.0
    %704 = vmatprep.subr.mxu0 0.0
    %705 = vmatpush1.xpose.msra.mxu0 0.0
    %706 = vmatprep.subr.mxu0 0.0
    %707 = vmatpush1.xpose.msra.mxu0 0.0
    %708 = vmatprep.subr.mxu0 0.0
    %709 = vmatpush1.xpose.msra.mxu0 0.0
    %710 = vmatprep.subr.mxu0 0.0
    %711 = vmatpush1.xpose.msra.mxu0 0.0
    %712 = vmatprep.subr.mxu0 0.0
    %713 = vmatpush1.xpose.msra.mxu0 0.0
    %714 = vmatprep.subr.mxu0 0.0
    %715 = vmatpush1.xpose.msra.mxu0 0.0
    %716 = vmatprep.subr.mxu0 0.0
    %717 = vmatpush1.xpose.msra.mxu0 0.0
    %718 = vmatprep.subr.mxu0 0.0
    %719 = vmatpush1.xpose.msra.mxu0 0.0
    %720 = vmatprep.subr.mxu0 0.0
    %721 = vmatpush1.xpose.msra.mxu0 0.0
    %722 = vmatprep.subr.mxu0 0.0
    %723 = vmatpush1.xpose.msra.mxu0 0.0
    %724 = vmatprep.subr.mxu0 0.0
    %725 = vmatpush1.xpose.msra.mxu0 0.0
    %726 = vmatprep.subr.mxu0 0.0
    %727 = vmatpush1.xpose.msra.mxu0 0.0
    %728 = vmatprep.subr.mxu0 0.0
    %729 = vmatpush1.xpose.msra.mxu0 0.0
    %730 = vmatprep.subr.mxu0 0.0
    %731 = vmatpush1.xpose.msra.mxu0 0.0
    %732 = vmatprep.subr.mxu0 0.0
    %733 = vmatpush1.xpose.msra.mxu0 0.0
    %734 = vmatprep.subr.mxu0 0.0
    %735 = vmatpush1.xpose.msra.mxu0 0.0
    %736 = vmatprep.subr.mxu0 0.0
    %737 = vmatpush1.xpose.msra.mxu0 0.0
    %738 = vmatprep.subr.mxu0 0.0
    %739 = vmatpush1.xpose.msra.mxu0 0.0
    %740 = vmatprep.mubr.f32.mxu0 0.0
    %741 = vmatmul.mubr.f32.gmra.mrb[0].mxu0 %v671
    %v742 = vpop.f32.mrb[0].mxu0
    %v743 = vadd.f32 0.0, %v742
    %v744 = vpop.f32.mrb[0].mxu0
    %745 = vdwg.mxu0
    %v746 = vlaneseq
    %v747 = vshrl.u32 %v746, 7
    %v748 = vsub.s32 0, %v747
    %v749 = vrot.slane %v743, %v748
    %v750 = vadd.f32 %v669, %v749
    %v751 = vmul.f32 %v663, 2.0
    %v752 = vsub.f32 %v750, %v751
    %v753 = vsub.f32 1.0, %v752
    %vm754 = vcmp.gt.f32.partialorder %v753, 0.0
    %vm755 = vmand %vm754, %vm23
    %v756 = vsel %vm755, %v753, 0.0
    %v757 = vsel %vm335, %v756, 0.0
    %v758 = vrot.slane %v757, 4
    %v759 = vadd.f32 %v757, %v758
    %v760 = vrot.slane %v759, 2
    %v761 = vadd.f32 %v759, %v760
    %v762 = vrot.slane %v761, 1
    %v763 = vadd.f32 %v761, %v762
    %v764 = vsel %vm335, %v763, 0.0
    %765 = vadd.xlane.f32.xlu0 %v764
    %v766 = vpop.xlane.xlu0 %765
    %v767 = vadd.f32 %v766, 0.0
    %s768 = scalar_lea.vmem %s0, 32
    %v769 = vld [vmem:[%s768] sm:$0xff]
    %v770 = vld [vmem:[%s768 + $0x8] sm:$0xff]
    %v771 = vld [vmem:[%s768 + $0x10] sm:$0xff]
    %v772 = vld [vmem:[%s768 + $0x18] sm:$0xff]
    %s773 = scalar_lea.vmem %s1, 32
    %v774 = vld [vmem:[%s773] sm:$0xff]
    %v775 = vld [vmem:[%s773 + $0x8] sm:$0xff]
    %v776 = vld [vmem:[%s773 + $0x10] sm:$0xff]
    %v777 = vld [vmem:[%s773 + $0x18] sm:$0xff]
    %778 = vmatprep.subr.mxu0 0.0
    %779 = vmatpush1.msra.mxu0 %v769
    %780 = vmatprep.subr.mxu0 0.0
    %781 = vmatpush1.msra.mxu0 %v770
    %782 = vmatprep.subr.mxu0 0.0
    %783 = vmatpush1.msra.mxu0 %v771
    %784 = vmatprep.subr.mxu0 0.0
    %785 = vmatpush1.msra.mxu0 %v772
    %786 = vmatprep.subr.mxu0 0.0
    %787 = vmatpush1.msra.mxu0 0.0
    %788 = vmatprep.subr.mxu0 0.0
    %789 = vmatpush1.msra.mxu0 0.0
    %790 = vmatprep.subr.mxu0 0.0
    %791 = vmatpush1.msra.mxu0 0.0
    %792 = vmatprep.subr.mxu0 0.0
    %793 = vmatpush1.msra.mxu0 0.0
    %794 = vmatprep.subr.mxu0 0.0
    %795 = vmatpush1.msra.mxu0 0.0
    %796 = vmatprep.subr.mxu0 0.0
    %797 = vmatpush1.msra.mxu0 0.0
    %798 = vmatprep.subr.mxu0 0.0
    %799 = vmatpush1.msra.mxu0 0.0
    %800 = vmatprep.subr.mxu0 0.0
    %801 = vmatpush1.msra.mxu0 0.0
    %802 = vmatprep.subr.mxu0 0.0
    %803 = vmatpush1.msra.mxu0 0.0
    %804 = vmatprep.subr.mxu0 0.0
    %805 = vmatpush1.msra.mxu0 0.0
    %806 = vmatprep.subr.mxu0 0.0
    %807 = vmatpush1.msra.mxu0 0.0
    %808 = vmatprep.subr.mxu0 0.0
    %809 = vmatpush1.msra.mxu0 0.0
    %810 = vmatprep.subr.mxu0 0.0
    %811 = vmatpush1.msra.mxu0 0.0
    %812 = vmatprep.subr.mxu0 0.0
    %813 = vmatpush1.msra.mxu0 0.0
    %814 = vmatprep.subr.mxu0 0.0
    %815 = vmatpush1.msra.mxu0 0.0
    %816 = vmatprep.subr.mxu0 0.0
    %817 = vmatpush1.msra.mxu0 0.0
    %818 = vmatprep.subr.mxu0 0.0
    %819 = vmatpush1.msra.mxu0 0.0
    %820 = vmatprep.subr.mxu0 0.0
    %821 = vmatpush1.msra.mxu0 0.0
    %822 = vmatprep.subr.mxu0 0.0
    %823 = vmatpush1.msra.mxu0 0.0
    %824 = vmatprep.subr.mxu0 0.0
    %825 = vmatpush1.msra.mxu0 0.0
    %826 = vmatprep.subr.mxu0 0.0
    %827 = vmatpush1.msra.mxu0 0.0
    %828 = vmatprep.subr.mxu0 0.0
    %829 = vmatpush1.msra.mxu0 0.0
    %830 = vmatprep.subr.mxu0 0.0
    %831 = vmatpush1.msra.mxu0 0.0
    %832 = vmatprep.subr.mxu0 0.0
    %833 = vmatpush1.msra.mxu0 0.0
    %834 = vmatprep.subr.mxu0 0.0
    %835 = vmatpush1.msra.mxu0 0.0
    %836 = vmatprep.subr.mxu0 0.0
    %837 = vmatpush1.msra.mxu0 0.0
    %838 = vmatprep.subr.mxu0 0.0
    %839 = vmatpush1.msra.mxu0 0.0
    %840 = vmatprep.subr.mxu0 0.0
    %841 = vmatpush1.msra.mxu0 0.0
    %842 = vmatprep.mubr.f32.mxu0 0.0
    %843 = vmatmul.mubr.f32.gmra.mrb[0].mxu0 %v34
    %v844 = vpop.f32.mrb[0].mxu0
    %v845 = vadd.f32 0.0, %v844
    %v846 = vpop.f32.mrb[0].mxu0
    %847 = vdwg.mxu0
    %v848 = vsel %vm106, %v845, -inf
    %849 = vmax.xlane.f32.xlu0 %v848
    %v850 = vpop.xlane.xlu0 %849
    %v851 = vsub.f32 %v845, %v850
    %v852 = vmul.f32 %v851, 1.442695
    %v853 = vpow.pop %v852
    %v854 = vsel %vm106, %v853, 0.0
    %855 = vadd.xlane.f32.xlu0 %v854
    %v856 = vpop.xlane.xlu0 %855
    %v857 = vrcp.pop %v856
    %v858 = vmul.f32 %v853, %v857
    %v860 = vsel %vm106, %v858, 0
    %v863 = vsel %vm106, %v769, 0
    %v866 = vsel %vm106, %v770, 0
    %v869 = vsel %vm106, %v771, 0
    %v872 = vsel %vm106, %v772, 0
    %874 = vmatprep.subr.mxu0 0.0
    %875 = vmatpush1.xpose.msra.mxu0 %v863
    %876 = vmatprep.subr.mxu0 0.0
    %877 = vmatpush1.xpose.msra.mxu0 %v866
    %878 = vmatprep.subr.mxu0 0.0
    %879 = vmatpush1.xpose.msra.mxu0 %v869
    %880 = vmatprep.subr.mxu0 0.0
    %881 = vmatpush1.xpose.msra.mxu0 %v872
    %882 = vmatprep.subr.mxu0 0.0
    %883 = vmatpush1.xpose.msra.mxu0 0.0
    %884 = vmatprep.subr.mxu0 0.0
    %885 = vmatpush1.xpose.msra.mxu0 0.0
    %886 = vmatprep.subr.mxu0 0.0
    %887 = vmatpush1.xpose.msra.mxu0 0.0
    %888 = vmatprep.subr.mxu0 0.0
    %889 = vmatpush1.xpose.msra.mxu0 0.0
    %890 = vmatprep.subr.mxu0 0.0
    %891 = vmatpush1.xpose.msra.mxu0 0.0
    %892 = vmatprep.subr.mxu0 0.0
    %893 = vmatpush1.xpose.msra.mxu0 0.0
    %894 = vmatprep.subr.mxu0 0.0
    %895 = vmatpush1.xpose.msra.mxu0 0.0
    %896 = vmatprep.subr.mxu0 0.0
    %897 = vmatpush1.xpose.msra.mxu0 0.0
    %898 = vmatprep.subr.mxu0 0.0
    %899 = vmatpush1.xpose.msra.mxu0 0.0
    %900 = vmatprep.subr.mxu0 0.0
    %901 = vmatpush1.xpose.msra.mxu0 0.0
    %902 = vmatprep.subr.mxu0 0.0
    %903 = vmatpush1.xpose.msra.mxu0 0.0
    %904 = vmatprep.subr.mxu0 0.0
    %905 = vmatpush1.xpose.msra.mxu0 0.0
    %906 = vmatprep.subr.mxu0 0.0
    %907 = vmatpush1.xpose.msra.mxu0 0.0
    %908 = vmatprep.subr.mxu0 0.0
    %909 = vmatpush1.xpose.msra.mxu0 0.0
    %910 = vmatprep.subr.mxu0 0.0
    %911 = vmatpush1.xpose.msra.mxu0 0.0
    %912 = vmatprep.subr.mxu0 0.0
    %913 = vmatpush1.xpose.msra.mxu0 0.0
    %914 = vmatprep.subr.mxu0 0.0
    %915 = vmatpush1.xpose.msra.mxu0 0.0
    %916 = vmatprep.subr.mxu0 0.0
    %917 = vmatpush1.xpose.msra.mxu0 0.0
    %918 = vmatprep.subr.mxu0 0.0
    %919 = vmatpush1.xpose.msra.mxu0 0.0
    %920 = vmatprep.subr.mxu0 0.0
    %921 = vmatpush1.xpose.msra.mxu0 0.0
    %922 = vmatprep.subr.mxu0 0.0
    %923 = vmatpush1.xpose.msra.mxu0 0.0
    %924 = vmatprep.subr.mxu0 0.0
    %925 = vmatpush1.xpose.msra.mxu0 0.0
    %926 = vmatprep.subr.mxu0 0.0
    %927 = vmatpush1.xpose.msra.mxu0 0.0
    %928 = vmatprep.subr.mxu0 0.0
    %929 = vmatpush1.xpose.msra.mxu0 0.0
    %930 = vmatprep.subr.mxu0 0.0
    %931 = vmatpush1.xpose.msra.mxu0 0.0
    %932 = vmatprep.subr.mxu0 0.0
    %933 = vmatpush1.xpose.msra.mxu0 0.0
    %934 = vmatprep.subr.mxu0 0.0
    %935 = vmatpush1.xpose.msra.mxu0 0.0
    %936 = vmatprep.subr.mxu0 0.0
    %937 = vmatpush1.xpose.msra.mxu0 0.0
    %938 = vmatprep.mubr.f32.mxu0 0.0
    %939 = vmatmul.mubr.f32.gmra.mrb[0].mxu0 %v860
    %v940 = vpop.f32.mrb[0].mxu0
    %v941 = vadd.f32 0.0, %v940
    %v942 = vpop.f32.mrb[0].mxu0
    %943 = vdwg.mxu0
    %s944 = scalar_lea.vmem [#allocation2], 8
    %945 = vst.msk [vmem:[%s944] sm:$0xff] %vm32, %v941
    %v946 = vmul.f32 %v941, %v941
    %v947 = vsel %vm32, %v946, 0.0
    %948 = vadd.xlane.f32.xlu0 %v947
    %v949 = vpop.xlane.xlu0 %948
    %v950 = vmax.f32 %v949, 1e-24
    %v951 = vrsqrt.pop %v950
    %v952 = vmul.f32 %v941, %v951
    %v954 = vsel %vm32, %v952, 0
    %956 = vmatprep.subr.mxu0 0.0
    %957 = vmatpush1.msra.mxu0 %v774
    %958 = vmatprep.subr.mxu0 0.0
    %959 = vmatpush1.msra.mxu0 %v775
    %960 = vmatprep.subr.mxu0 0.0
    %961 = vmatpush1.msra.mxu0 %v776
    %962 = vmatprep.subr.mxu0 0.0
    %963 = vmatpush1.msra.mxu0 %v777
    %964 = vmatprep.subr.mxu0 0.0
    %965 = vmatpush1.msra.mxu0 0.0
    %966 = vmatprep.subr.mxu0 0.0
    %967 = vmatpush1.msra.mxu0 0.0
    %968 = vmatprep.subr.mxu0 0.0
    %969 = vmatpush1.msra.mxu0 0.0
    %970 = vmatprep.subr.mxu0 0.0
    %971 = vmatpush1.msra.mxu0 0.0
    %972 = vmatprep.subr.mxu0 0.0
    %973 = vmatpush1.msra.mxu0 0.0
    %974 = vmatprep.subr.mxu0 0.0
    %975 = vmatpush1.msra.mxu0 0.0
    %976 = vmatprep.subr.mxu0 0.0
    %977 = vmatpush1.msra.mxu0 0.0
    %978 = vmatprep.subr.mxu0 0.0
    %979 = vmatpush1.msra.mxu0 0.0
    %980 = vmatprep.subr.mxu0 0.0
    %981 = vmatpush1.msra.mxu0 0.0
    %982 = vmatprep.subr.mxu0 0.0
    %983 = vmatpush1.msra.mxu0 0.0
    %984 = vmatprep.subr.mxu0 0.0
    %985 = vmatpush1.msra.mxu0 0.0
    %986 = vmatprep.subr.mxu0 0.0
    %987 = vmatpush1.msra.mxu0 0.0
    %988 = vmatprep.subr.mxu0 0.0
    %989 = vmatpush1.msra.mxu0 0.0
    %990 = vmatprep.subr.mxu0 0.0
    %991 = vmatpush1.msra.mxu0 0.0
    %992 = vmatprep.subr.mxu0 0.0
    %993 = vmatpush1.msra.mxu0 0.0
    %994 = vmatprep.subr.mxu0 0.0
    %995 = vmatpush1.msra.mxu0 0.0
    %996 = vmatprep.subr.mxu0 0.0
    %997 = vmatpush1.msra.mxu0 0.0
    %998 = vmatprep.subr.mxu0 0.0
    %999 = vmatpush1.msra.mxu0 0.0
    %1000 = vmatprep.subr.mxu0 0.0
    %1001 = vmatpush1.msra.mxu0 0.0
    %1002 = vmatprep.subr.mxu0 0.0
    %1003 = vmatpush1.msra.mxu0 0.0
    %1004 = vmatprep.subr.mxu0 0.0
    %1005 = vmatpush1.msra.mxu0 0.0
    %1006 = vmatprep.subr.mxu0 0.0
    %1007 = vmatpush1.msra.mxu0 0.0
    %1008 = vmatprep.subr.mxu0 0.0
    %1009 = vmatpush1.msra.mxu0 0.0
    %1010 = vmatprep.subr.mxu0 0.0
    %1011 = vmatpush1.msra.mxu0 0.0
    %1012 = vmatprep.subr.mxu0 0.0
    %1013 = vmatpush1.msra.mxu0 0.0
    %1014 = vmatprep.subr.mxu0 0.0
    %1015 = vmatpush1.msra.mxu0 0.0
    %1016 = vmatprep.subr.mxu0 0.0
    %1017 = vmatpush1.msra.mxu0 0.0
    %1018 = vmatprep.subr.mxu0 0.0
    %1019 = vmatpush1.msra.mxu0 0.0
    %1020 = vmatprep.mubr.f32.mxu0 0.0
    %1021 = vmatmul.mubr.f32.gmra.mrb[0].mxu0 %v954
    %v1022 = vpop.f32.mrb[0].mxu0
    %v1023 = vadd.f32 0.0, %v1022
    %v1024 = vpop.f32.mrb[0].mxu0
    %1025 = vdwg.mxu0
    %v1026 = vsel %vm106, %v1023, -inf
    %v1027 = vrot.slane %v1026, 4
    %v1028 = vmax.f32 %v1026, %v1027
    %v1029 = vrot.slane %v1028, 2
    %v1030 = vmax.f32 %v1028, %v1029
    %v1031 = vrot.slane %v1030, 1
    %v1032 = vmax.f32 %v1030, %v1031
    %v1033 = vsub.f32 %v1023, %v1032
    %v1034 = vmul.f32 %v1033, 1.442695
    %v1035 = vpow.pop %v1034
    %v1036 = vsel %vm106, %v1035, 0.0
    %v1037 = vrot.slane %v1036, 4
    %v1038 = vadd.f32 %v1036, %v1037
    %v1039 = vrot.slane %v1038, 2
    %v1040 = vadd.f32 %v1038, %v1039
    %v1041 = vrot.slane %v1040, 1
    %v1042 = vadd.f32 %v1040, %v1041
    %v1043 = vrcp.pop %v1042
    %v1044 = vmul.f32 %v1035, %v1043
    %1045 = vxpose.xlu0.b32.start [1/16] %v952, 128
    %1046 = vxpose.xlu0.b32.cont [2/16] 0.0, 128
    %1047 = vxpose.xlu0.b32.cont [3/16] 0.0, 128
    %1048 = vxpose.xlu0.b32.cont [4/16] 0.0, 128
    %1049 = vxpose.xlu0.b32.cont [5/16] 0.0, 128
    %1050 = vxpose.xlu0.b32.cont [6/16] 0.0, 128
    %1051 = vxpose.xlu0.b32.cont [7/16] 0.0, 128
    %1052 = vxpose.xlu0.b32.cont [8/16] 0.0, 128
    %1053 = vxpose.xlu0.b32.cont [9/16] 0.0, 128
    %1054 = vxpose.xlu0.b32.cont [10/16] 0.0, 128
    %1055 = vxpose.xlu0.b32.cont [11/16] 0.0, 128
    %1056 = vxpose.xlu0.b32.cont [12/16] 0.0, 128
    %1057 = vxpose.xlu0.b32.cont [13/16] 0.0, 128
    %1058 = vxpose.xlu0.b32.cont [14/16] 0.0, 128
    %1059 = vxpose.xlu0.b32.cont [15/16] 0.0, 128
    %1060 = vxpose.xlu0.b32.end [16/16] 0.0, 128
    %v1061 = vpop.trf.xlu0
    %v1062 = vpop.trf.xlu0
    %v1063 = vpop.trf.xlu0
    %v1064 = vpop.trf.xlu0
    %v1065 = vpop.trf.xlu0
    %v1066 = vpop.trf.xlu0
    %v1067 = vpop.trf.xlu0
    %v1068 = vpop.trf.xlu0
    %v1069 = vpop.trf.xlu0
    %v1070 = vpop.trf.xlu0
    %v1071 = vpop.trf.xlu0
    %v1072 = vpop.trf.xlu0
    %v1073 = vpop.trf.xlu0
    %v1074 = vpop.trf.xlu0
    %v1075 = vpop.trf.xlu0
    %v1076 = vpop.trf.xlu0
    %v1078 = vsel %vm335, %v1061, 0
    %v1081 = vsel %vm335, %v1062, 0
    %v1084 = vsel %vm335, %v1063, 0
    %v1087 = vsel %vm335, %v1064, 0
    %1089 = vmatprep.subr.mxu0 0.0
    %1090 = vmatpush1.msra.mxu0 %v1044
    %1091 = vmatprep.subr.mxu0 0.0
    %1092 = vmatpush1.msra.mxu0 0.0
    %1093 = vmatprep.subr.mxu0 0.0
    %1094 = vmatpush1.msra.mxu0 0.0
    %1095 = vmatprep.subr.mxu0 0.0
    %1096 = vmatpush1.msra.mxu0 0.0
    %1097 = vmatprep.subr.mxu0 0.0
    %1098 = vmatpush1.msra.mxu0 0.0
    %1099 = vmatprep.subr.mxu0 0.0
    %1100 = vmatpush1.msra.mxu0 0.0
    %1101 = vmatprep.subr.mxu0 0.0
    %1102 = vmatpush1.msra.mxu0 0.0
    %1103 = vmatprep.subr.mxu0 0.0
    %1104 = vmatpush1.msra.mxu0 0.0
    %1105 = vmatprep.subr.mxu0 0.0
    %1106 = vmatpush1.msra.mxu0 0.0
    %1107 = vmatprep.subr.mxu0 0.0
    %1108 = vmatpush1.msra.mxu0 0.0
    %1109 = vmatprep.subr.mxu0 0.0
    %1110 = vmatpush1.msra.mxu0 0.0
    %1111 = vmatprep.subr.mxu0 0.0
    %1112 = vmatpush1.msra.mxu0 0.0
    %1113 = vmatprep.subr.mxu0 0.0
    %1114 = vmatpush1.msra.mxu0 0.0
    %1115 = vmatprep.subr.mxu0 0.0
    %1116 = vmatpush1.msra.mxu0 0.0
    %1117 = vmatprep.subr.mxu0 0.0
    %1118 = vmatpush1.msra.mxu0 0.0
    %1119 = vmatprep.subr.mxu0 0.0
    %1120 = vmatpush1.msra.mxu0 0.0
    %1121 = vmatprep.subr.mxu0 0.0
    %1122 = vmatpush1.msra.mxu0 0.0
    %1123 = vmatprep.subr.mxu0 0.0
    %1124 = vmatpush1.msra.mxu0 0.0
    %1125 = vmatprep.subr.mxu0 0.0
    %1126 = vmatpush1.msra.mxu0 0.0
    %1127 = vmatprep.subr.mxu0 0.0
    %1128 = vmatpush1.msra.mxu0 0.0
    %1129 = vmatprep.subr.mxu0 0.0
    %1130 = vmatpush1.msra.mxu0 0.0
    %1131 = vmatprep.subr.mxu0 0.0
    %1132 = vmatpush1.msra.mxu0 0.0
    %1133 = vmatprep.subr.mxu0 0.0
    %1134 = vmatpush1.msra.mxu0 0.0
    %1135 = vmatprep.subr.mxu0 0.0
    %1136 = vmatpush1.msra.mxu0 0.0
    %1137 = vmatprep.subr.mxu0 0.0
    %1138 = vmatpush1.msra.mxu0 0.0
    %1139 = vmatprep.subr.mxu0 0.0
    %1140 = vmatpush1.msra.mxu0 0.0
    %1141 = vmatprep.subr.mxu0 0.0
    %1142 = vmatpush1.msra.mxu0 0.0
    %1143 = vmatprep.subr.mxu0 0.0
    %1144 = vmatpush1.msra.mxu0 0.0
    %1145 = vmatprep.subr.mxu0 0.0
    %1146 = vmatpush1.msra.mxu0 0.0
    %1147 = vmatprep.subr.mxu0 0.0
    %1148 = vmatpush1.msra.mxu0 0.0
    %1149 = vmatprep.subr.mxu0 0.0
    %1150 = vmatpush1.msra.mxu0 0.0
    %1151 = vmatprep.subr.mxu0 0.0
    %1152 = vmatpush1.msra.mxu0 0.0
    %1153 = vmatprep.mubr.f32.mxu0 0.0
    %1154 = vmatmul.mubr.f32.gmra.mrb[0].mxu0 %v1078
    %v1155 = vpop.f32.mrb[0].mxu0
    %v1156 = vadd.f32 0.0, %v1155
    %v1157 = vpop.f32.mrb[0].mxu0
    %1158 = vmatprep.mubr.f32.mxu0 0.0
    %1159 = vmatmul.mubr.f32.gmra.mrb[0].mxu0 %v1081
    %v1160 = vpop.f32.mrb[0].mxu0
    %v1161 = vadd.f32 0.0, %v1160
    %v1162 = vpop.f32.mrb[0].mxu0
    %1163 = vmatprep.mubr.f32.mxu0 0.0
    %1164 = vmatmul.mubr.f32.gmra.mrb[0].mxu0 %v1084
    %v1165 = vpop.f32.mrb[0].mxu0
    %v1166 = vadd.f32 0.0, %v1165
    %v1167 = vpop.f32.mrb[0].mxu0
    %1168 = vmatprep.mubr.f32.mxu0 0.0
    %1169 = vmatmul.mubr.f32.gmra.mrb[0].mxu0 %v1087
    %v1170 = vpop.f32.mrb[0].mxu0
    %v1171 = vadd.f32 0.0, %v1170
    %v1172 = vpop.f32.mrb[0].mxu0
    %1173 = vdwg.mxu0
    %v1174 = vmul.f32 %v1156, %v1156
    %v1175 = vmul.f32 %v1161, %v1161
    %v1176 = vmul.f32 %v1166, %v1166
    %v1177 = vmul.f32 %v1171, %v1171
    %v1178 = vsel %vm106, %v1174, 0.0
    %v1179 = vsel %vm106, %v1175, 0.0
    %v1180 = vadd.f32 %v1178, %v1179
    %v1181 = vsel %vm106, %v1176, 0.0
    %v1182 = vadd.f32 %v1180, %v1181
    %v1183 = vsel %vm106, %v1177, 0.0
    %v1184 = vadd.f32 %v1182, %v1183
    %v1185 = vrot.slane %v1184, 4
    %v1186 = vadd.f32 %v1184, %v1185
    %v1187 = vrot.slane %v1186, 2
    %v1188 = vadd.f32 %v1186, %v1187
    %v1189 = vrot.slane %v1188, 1
    %v1190 = vadd.f32 %v1188, %v1189
    %v1191 = vmax.f32 %v1190, 1e-24
    %v1192 = vrsqrt.pop %v1191
    %v1193 = vmul.f32 %v1156, %v1192
    %v1194 = vmul.f32 %v1161, %v1192
    %v1195 = vmul.f32 %v1166, %v1192
    %v1196 = vmul.f32 %v1171, %v1192
    %v1197 = vadd.f32 %v1193, %v774
    %v1198 = vadd.f32 %v1194, %v775
    %v1199 = vadd.f32 %v1195, %v776
    %v1200 = vadd.f32 %v1196, %v777
    %1205 = vrot.lane.b32.xlu0 %v1197, 64
    %v1206 = vpop.permute.xlu0 %1205
    %1207 = vrot.lane.b32.xlu0 %v1198, 64
    %v1208 = vpop.permute.xlu0 %1207
    %1209 = vrot.lane.b32.xlu0 %v1199, 64
    %v1210 = vpop.permute.xlu0 %1209
    %1211 = vrot.lane.b32.xlu0 %v1200, 64
    %v1212 = vpop.permute.xlu0 %1211
    %vm1217 = vcmask 1048064
    %1218 = vst.msk [vmem:[%s3] sm:$0xff] %vm1217, %v1206
    %1219 = vst.msk [vmem:[%s3 + $0x8] sm:$0xff] %vm1217, %v1208
    %1220 = vst.msk [vmem:[%s3 + $0x10] sm:$0xff] %vm1217, %v1210
    %1221 = vst.msk [vmem:[%s3 + $0x18] sm:$0xff] %vm1217, %v1212
    %v1222 = vsel %vm106, %v1044, -inf
    %v1223 = vrot.slane %v1222, 4
    %v1224 = vmax.f32 %v1222, %v1223
    %v1225 = vrot.slane %v1224, 2
    %v1226 = vmax.f32 %v1224, %v1225
    %v1227 = vrot.slane %v1226, 1
    %v1228 = vmax.f32 %v1226, %v1227
    %vm1229 = vcmp.eq.f32.partialorder %v1044, %v1228
    %v1230 = vsel %vm1229, %v20, 8
    %v1231 = vsel %vm106, %v1230, 2147483647
    %v1232 = vrot.slane %v1231, 4
    %vm1233 = vcmp.lt.s32.totalorder %v1231, %v1232
    %v1234 = vsel %vm1233, %v1231, %v1232
    %v1235 = vrot.slane %v1234, 2
    %vm1236 = vcmp.lt.s32.totalorder %v1234, %v1235
    %v1237 = vsel %vm1236, %v1234, %v1235
    %v1238 = vrot.slane %v1237, 1
    %vm1239 = vcmp.lt.s32.totalorder %v1237, %v1238
    %v1240 = vsel %vm1239, %v1237, %v1238
    %vm1241 = vcmp.eq.s32.totalorder %v20, %v1240
    %v1242 = vsel %vm1241, 1, 0
    %v1243 = vcvt.s32.f32 %v1242
    %1244 = vmatprep.subr.mxu0 0.0
    %1245 = vmatpush1.msra.mxu0 %v1243
    %1246 = vmatprep.subr.mxu0 0.0
    %1247 = vmatpush1.msra.mxu0 0.0
    %1248 = vmatprep.subr.mxu0 0.0
    %1249 = vmatpush1.msra.mxu0 0.0
    %1250 = vmatprep.subr.mxu0 0.0
    %1251 = vmatpush1.msra.mxu0 0.0
    %1252 = vmatprep.subr.mxu0 0.0
    %1253 = vmatpush1.msra.mxu0 0.0
    %1254 = vmatprep.subr.mxu0 0.0
    %1255 = vmatpush1.msra.mxu0 0.0
    %1256 = vmatprep.subr.mxu0 0.0
    %1257 = vmatpush1.msra.mxu0 0.0
    %1258 = vmatprep.subr.mxu0 0.0
    %1259 = vmatpush1.msra.mxu0 0.0
    %1260 = vmatprep.subr.mxu0 0.0
    %1261 = vmatpush1.msra.mxu0 0.0
    %1262 = vmatprep.subr.mxu0 0.0
    %1263 = vmatpush1.msra.mxu0 0.0
    %1264 = vmatprep.subr.mxu0 0.0
    %1265 = vmatpush1.msra.mxu0 0.0
    %1266 = vmatprep.subr.mxu0 0.0
    %1267 = vmatpush1.msra.mxu0 0.0
    %1268 = vmatprep.subr.mxu0 0.0
    %1269 = vmatpush1.msra.mxu0 0.0
    %1270 = vmatprep.subr.mxu0 0.0
    %1271 = vmatpush1.msra.mxu0 0.0
    %1272 = vmatprep.subr.mxu0 0.0
    %1273 = vmatpush1.msra.mxu0 0.0
    %1274 = vmatprep.subr.mxu0 0.0
    %1275 = vmatpush1.msra.mxu0 0.0
    %1276 = vmatprep.subr.mxu0 0.0
    %1277 = vmatpush1.msra.mxu0 0.0
    %1278 = vmatprep.subr.mxu0 0.0
    %1279 = vmatpush1.msra.mxu0 0.0
    %1280 = vmatprep.subr.mxu0 0.0
    %1281 = vmatpush1.msra.mxu0 0.0
    %1282 = vmatprep.subr.mxu0 0.0
    %1283 = vmatpush1.msra.mxu0 0.0
    %1284 = vmatprep.subr.mxu0 0.0
    %1285 = vmatpush1.msra.mxu0 0.0
    %1286 = vmatprep.subr.mxu0 0.0
    %1287 = vmatpush1.msra.mxu0 0.0
    %1288 = vmatprep.subr.mxu0 0.0
    %1289 = vmatpush1.msra.mxu0 0.0
    %1290 = vmatprep.subr.mxu0 0.0
    %1291 = vmatpush1.msra.mxu0 0.0
    %1292 = vmatprep.subr.mxu0 0.0
    %1293 = vmatpush1.msra.mxu0 0.0
    %1294 = vmatprep.subr.mxu0 0.0
    %1295 = vmatpush1.msra.mxu0 0.0
    %1296 = vmatprep.subr.mxu0 0.0
    %1297 = vmatpush1.msra.mxu0 0.0
    %1298 = vmatprep.subr.mxu0 0.0
    %1299 = vmatpush1.msra.mxu0 0.0
    %1300 = vmatprep.subr.mxu0 0.0
    %1301 = vmatpush1.msra.mxu0 0.0
    %1302 = vmatprep.subr.mxu0 0.0
    %1303 = vmatpush1.msra.mxu0 0.0
    %1304 = vmatprep.subr.mxu0 0.0
    %1305 = vmatpush1.msra.mxu0 0.0
    %1306 = vmatprep.subr.mxu0 0.0
    %1307 = vmatpush1.msra.mxu0 0.0
    %1308 = vmatprep.mubr.f32.mxu0 0.0
    %1309 = vmatmul.mubr.f32.gmra.mrb[0].mxu0 %v1078
    %v1310 = vpop.f32.mrb[0].mxu0
    %v1311 = vadd.f32 0.0, %v1310
    %v1312 = vpop.f32.mrb[0].mxu0
    %1313 = vmatprep.mubr.f32.mxu0 0.0
    %1314 = vmatmul.mubr.f32.gmra.mrb[0].mxu0 %v1081
    %v1315 = vpop.f32.mrb[0].mxu0
    %v1316 = vadd.f32 0.0, %v1315
    %v1317 = vpop.f32.mrb[0].mxu0
    %1318 = vmatprep.mubr.f32.mxu0 0.0
    %1319 = vmatmul.mubr.f32.gmra.mrb[0].mxu0 %v1084
    %v1320 = vpop.f32.mrb[0].mxu0
    %v1321 = vadd.f32 0.0, %v1320
    %v1322 = vpop.f32.mrb[0].mxu0
    %1323 = vmatprep.mubr.f32.mxu0 0.0
    %1324 = vmatmul.mubr.f32.gmra.mrb[0].mxu0 %v1087
    %v1325 = vpop.f32.mrb[0].mxu0
    %v1326 = vadd.f32 0.0, %v1325
    %v1327 = vpop.f32.mrb[0].mxu0
    %1328 = vdwg.mxu0
    %v1329 = vsub.f32 %v774, %v1311
    %v1330 = vsub.f32 %v775, %v1316
    %v1331 = vsub.f32 %v776, %v1321
    %v1332 = vsub.f32 %v777, %v1326
    %v1333 = vmul.f32 %v1329, %v1329
    %v1334 = vmul.f32 %v1330, %v1330
    %v1335 = vmul.f32 %v1331, %v1331
    %v1336 = vmul.f32 %v1332, %v1332
    %v1337 = vsel %vm106, %v1333, 0.0
    %v1338 = vsel %vm106, %v1334, 0.0
    %v1339 = vadd.f32 %v1337, %v1338
    %v1340 = vsel %vm106, %v1335, 0.0
    %v1341 = vadd.f32 %v1339, %v1340
    %v1342 = vsel %vm106, %v1336, 0.0
    %v1343 = vadd.f32 %v1341, %v1342
    %v1344 = vrot.slane %v1343, 4
    %v1345 = vadd.f32 %v1343, %v1344
    %v1346 = vrot.slane %v1345, 2
    %v1347 = vadd.f32 %v1345, %v1346
    %v1348 = vrot.slane %v1347, 1
    %v1349 = vadd.f32 %v1347, %v1348
    %v1350 = vsel %vm106, %v1349, 0.0
    %1351 = vadd.xlane.f32.xlu0 %v1350
    %v1352 = vpop.xlane.xlu0 %1351
    %v1353 = vadd.f32 %v595, %v1352
    %1354 = vmatprep.subr.mxu0 0.0
    %1355 = vmatpush1.xpose.msra.mxu0 %v954
    %1356 = vmatprep.subr.mxu0 0.0
    %1357 = vmatpush1.xpose.msra.mxu0 0.0
    %1358 = vmatprep.subr.mxu0 0.0
    %1359 = vmatpush1.xpose.msra.mxu0 0.0
    %1360 = vmatprep.subr.mxu0 0.0
    %1361 = vmatpush1.xpose.msra.mxu0 0.0
    %1362 = vmatprep.subr.mxu0 0.0
    %1363 = vmatpush1.xpose.msra.mxu0 0.0
    %1364 = vmatprep.subr.mxu0 0.0
    %1365 = vmatpush1.xpose.msra.mxu0 0.0
    %1366 = vmatprep.subr.mxu0 0.0
    %1367 = vmatpush1.xpose.msra.mxu0 0.0
    %1368 = vmatprep.subr.mxu0 0.0
    %1369 = vmatpush1.xpose.msra.mxu0 0.0
    %1370 = vmatprep.subr.mxu0 0.0
    %1371 = vmatpush1.xpose.msra.mxu0 0.0
    %1372 = vmatprep.subr.mxu0 0.0
    %1373 = vmatpush1.xpose.msra.mxu0 0.0
    %1374 = vmatprep.subr.mxu0 0.0
    %1375 = vmatpush1.xpose.msra.mxu0 0.0
    %1376 = vmatprep.subr.mxu0 0.0
    %1377 = vmatpush1.xpose.msra.mxu0 0.0
    %1378 = vmatprep.subr.mxu0 0.0
    %1379 = vmatpush1.xpose.msra.mxu0 0.0
    %1380 = vmatprep.subr.mxu0 0.0
    %1381 = vmatpush1.xpose.msra.mxu0 0.0
    %1382 = vmatprep.subr.mxu0 0.0
    %1383 = vmatpush1.xpose.msra.mxu0 0.0
    %1384 = vmatprep.subr.mxu0 0.0
    %1385 = vmatpush1.xpose.msra.mxu0 0.0
    %1386 = vmatprep.subr.mxu0 0.0
    %1387 = vmatpush1.xpose.msra.mxu0 0.0
    %1388 = vmatprep.subr.mxu0 0.0
    %1389 = vmatpush1.xpose.msra.mxu0 0.0
    %1390 = vmatprep.subr.mxu0 0.0
    %1391 = vmatpush1.xpose.msra.mxu0 0.0
    %1392 = vmatprep.subr.mxu0 0.0
    %1393 = vmatpush1.xpose.msra.mxu0 0.0
    %1394 = vmatprep.subr.mxu0 0.0
    %1395 = vmatpush1.xpose.msra.mxu0 0.0
    %1396 = vmatprep.subr.mxu0 0.0
    %1397 = vmatpush1.xpose.msra.mxu0 0.0
    %1398 = vmatprep.subr.mxu0 0.0
    %1399 = vmatpush1.xpose.msra.mxu0 0.0
    %1400 = vmatprep.subr.mxu0 0.0
    %1401 = vmatpush1.xpose.msra.mxu0 0.0
    %1402 = vmatprep.subr.mxu0 0.0
    %1403 = vmatpush1.xpose.msra.mxu0 0.0
    %1404 = vmatprep.subr.mxu0 0.0
    %1405 = vmatpush1.xpose.msra.mxu0 0.0
    %1406 = vmatprep.subr.mxu0 0.0
    %1407 = vmatpush1.xpose.msra.mxu0 0.0
    %1408 = vmatprep.subr.mxu0 0.0
    %1409 = vmatpush1.xpose.msra.mxu0 0.0
    %1410 = vmatprep.subr.mxu0 0.0
    %1411 = vmatpush1.xpose.msra.mxu0 0.0
    %1412 = vmatprep.subr.mxu0 0.0
    %1413 = vmatpush1.xpose.msra.mxu0 0.0
    %1414 = vmatprep.subr.mxu0 0.0
    %1415 = vmatpush1.xpose.msra.mxu0 0.0
    %1416 = vmatprep.subr.mxu0 0.0
    %1417 = vmatpush1.xpose.msra.mxu0 0.0
    %1418 = vmatprep.mubr.f32.mxu0 0.0
    %1419 = vmatmul.mubr.f32.gmra.mrb[0].mxu0 %v954
    %v1420 = vpop.f32.mrb[0].mxu0
    %v1421 = vadd.f32 0.0, %v1420
    %v1422 = vpop.f32.mrb[0].mxu0
    %1423 = vdwg.mxu0
    %v1424 = vmul.f32 %v952, %v952
    %v1425 = vsel %vm32, %v1424, 0.0
    %1426 = vadd.xlane.f32.xlu0 %v1425
    %v1427 = vpop.xlane.xlu0 %1426
    %v1429 = vsel %vm32, %v1424, 0
    %1431 = vmatprep.subr.mxu0 0.0
    %1432 = vmatpush1.xpose.msra.mxu0 %v1429
    %1433 = vmatprep.subr.mxu0 0.0
    %1434 = vmatpush1.xpose.msra.mxu0 0.0
    %1435 = vmatprep.subr.mxu0 0.0
    %1436 = vmatpush1.xpose.msra.mxu0 0.0
    %1437 = vmatprep.subr.mxu0 0.0
    %1438 = vmatpush1.xpose.msra.mxu0 0.0
    %1439 = vmatprep.subr.mxu0 0.0
    %1440 = vmatpush1.xpose.msra.mxu0 0.0
    %1441 = vmatprep.subr.mxu0 0.0
    %1442 = vmatpush1.xpose.msra.mxu0 0.0
    %1443 = vmatprep.subr.mxu0 0.0
    %1444 = vmatpush1.xpose.msra.mxu0 0.0
    %1445 = vmatprep.subr.mxu0 0.0
    %1446 = vmatpush1.xpose.msra.mxu0 0.0
    %1447 = vmatprep.subr.mxu0 0.0
    %1448 = vmatpush1.xpose.msra.mxu0 0.0
    %1449 = vmatprep.subr.mxu0 0.0
    %1450 = vmatpush1.xpose.msra.mxu0 0.0
    %1451 = vmatprep.subr.mxu0 0.0
    %1452 = vmatpush1.xpose.msra.mxu0 0.0
    %1453 = vmatprep.subr.mxu0 0.0
    %1454 = vmatpush1.xpose.msra.mxu0 0.0
    %1455 = vmatprep.subr.mxu0 0.0
    %1456 = vmatpush1.xpose.msra.mxu0 0.0
    %1457 = vmatprep.subr.mxu0 0.0
    %1458 = vmatpush1.xpose.msra.mxu0 0.0
    %1459 = vmatprep.subr.mxu0 0.0
    %1460 = vmatpush1.xpose.msra.mxu0 0.0
    %1461 = vmatprep.subr.mxu0 0.0
    %1462 = vmatpush1.xpose.msra.mxu0 0.0
    %1463 = vmatprep.subr.mxu0 0.0
    %1464 = vmatpush1.xpose.msra.mxu0 0.0
    %1465 = vmatprep.subr.mxu0 0.0
    %1466 = vmatpush1.xpose.msra.mxu0 0.0
    %1467 = vmatprep.subr.mxu0 0.0
    %1468 = vmatpush1.xpose.msra.mxu0 0.0
    %1469 = vmatprep.subr.mxu0 0.0
    %1470 = vmatpush1.xpose.msra.mxu0 0.0
    %1471 = vmatprep.subr.mxu0 0.0
    %1472 = vmatpush1.xpose.msra.mxu0 0.0
    %1473 = vmatprep.subr.mxu0 0.0
    %1474 = vmatpush1.xpose.msra.mxu0 0.0
    %1475 = vmatprep.subr.mxu0 0.0
    %1476 = vmatpush1.xpose.msra.mxu0 0.0
    %1477 = vmatprep.subr.mxu0 0.0
    %1478 = vmatpush1.xpose.msra.mxu0 0.0
    %1479 = vmatprep.subr.mxu0 0.0
    %1480 = vmatpush1.xpose.msra.mxu0 0.0
    %1481 = vmatprep.subr.mxu0 0.0
    %1482 = vmatpush1.xpose.msra.mxu0 0.0
    %1483 = vmatprep.subr.mxu0 0.0
    %1484 = vmatpush1.xpose.msra.mxu0 0.0
    %1485 = vmatprep.subr.mxu0 0.0
    %1486 = vmatpush1.xpose.msra.mxu0 0.0
    %1487 = vmatprep.subr.mxu0 0.0
    %1488 = vmatpush1.xpose.msra.mxu0 0.0
    %1489 = vmatprep.subr.mxu0 0.0
    %1490 = vmatpush1.xpose.msra.mxu0 0.0
    %1491 = vmatprep.subr.mxu0 0.0
    %1492 = vmatpush1.xpose.msra.mxu0 0.0
    %1493 = vmatprep.subr.mxu0 0.0
    %1494 = vmatpush1.xpose.msra.mxu0 0.0
    %1495 = vmatprep.mubr.f32.mxu0 0.0
    %1496 = vmatmul.mubr.f32.gmra.mrb[0].mxu0 %v671
    %v1497 = vpop.f32.mrb[0].mxu0
    %v1498 = vadd.f32 0.0, %v1497
    %v1499 = vpop.f32.mrb[0].mxu0
    %1500 = vdwg.mxu0
    %v1501 = vlaneseq
    %v1502 = vshrl.u32 %v1501, 7
    %v1503 = vsub.s32 0, %v1502
    %v1504 = vrot.slane %v1498, %v1503
    %v1505 = vadd.f32 %v1427, %v1504
    %v1506 = vmul.f32 %v1421, 2.0
    %v1507 = vsub.f32 %v1505, %v1506
    %v1508 = vsub.f32 1.0, %v1507
    %vm1509 = vcmp.gt.f32.partialorder %v1508, 0.0
    %vm1510 = vmand %vm1509, %vm23
    %v1511 = vsel %vm1510, %v1508, 0.0
    %v1512 = vsel %vm335, %v1511, 0.0
    %v1513 = vrot.slane %v1512, 4
    %v1514 = vadd.f32 %v1512, %v1513
    %v1515 = vrot.slane %v1514, 2
    %v1516 = vadd.f32 %v1514, %v1515
    %v1517 = vrot.slane %v1516, 1
    %v1518 = vadd.f32 %v1516, %v1517
    %v1519 = vsel %vm335, %v1518, 0.0
    %1520 = vadd.xlane.f32.xlu0 %v1519
    %v1521 = vpop.xlane.xlu0 %1520
    %v1522 = vadd.f32 %v767, %v1521
    %v1523 = vsub.f32 %v952, %v210
    %v1524 = vmul.f32 %v1523, %v1523
    %v1525 = vsel %vm32, %v1524, 0.0
    %v1526 = vrot.slane %v1525, 4
    %v1527 = vadd.f32 %v1525, %v1526
    %v1528 = vrot.slane %v1527, 2
    %v1529 = vadd.f32 %v1527, %v1528
    %v1530 = vrot.slane %v1529, 1
    %v1531 = vadd.f32 %v1529, %v1530
    %v1532 = vsel %vm32, %v1531, 0.0
    %1533 = vadd.xlane.f32.xlu0 %v1532
    %v1534 = vpop.xlane.xlu0 %1533
    %v1535 = vadd.f32 %v1534, 0.0
    %v1536 = vmul.f32 %v1353, 0.00024414063
    %v1537 = vmul.f32 %v1522, 0.017857144
    %v1538 = vmul.f32 %v1535, 0.125
    %vm1539 = vcmask 0
    %1540 = vst.msk [vmem:[%s5] sm:$0x1] %vm1539, %v1536
    %vm1541 = vcmask 8200
    %1542 = vst.msk [vmem:[%s5] sm:$0x1] %vm1541, %v1538
    %vm1543 = vcmask 16400
    %1544 = vst.msk [vmem:[%s5] sm:$0x1] %vm1543, %v1537
    // Predicated region
    $region14: #{meta_prototype_forward.1} parent=1 // pred_check
      _
    $region15: #{meta_prototype_forward.1} parent=1 // pred_check_branch
      %1546 = sbr.rel (0) target = $region17
    $region16: #{meta_prototype_forward.1} parent=1 // pred_region
      _
    $region17: #{meta_prototype_forward.1} parent=1 // pred_fallthru
      _
    // Predicated region
    $region18: #{meta_prototype_forward.1} parent=1 // pred_check
      _
    $region19: #{meta_prototype_forward.1} parent=1 // pred_check_branch
      %1548 = sbr.rel (0) target = $region21
    $region20: #{meta_prototype_forward.1} parent=1 // pred_region
      %s1550 = ssub.s32 256, 256
      %1551 = vsyncadd [#allocation3], %s1550
      %s1552 = sshll.u32 [#allocation2], 4
      %s1553 = int_to_ptr.vmem [resolvable:$true] %s1552
      %1558 = dma.vmem_to_hbm [thread:$0]  %s1553, 256, %s4, [#allocation3], 128, 128, 8
    $region21: #{meta_prototype_forward.1} parent=1 // pred_fallthru
      _
    // Predicated region
    $region22: #{meta_prototype_forward.1} parent=1 // pred_check
      _
    $region23: #{meta_prototype_forward.1} parent=1 // pred_check_branch
      %1560 = sbr.rel (0) target = $region25
    $region24: #{meta_prototype_forward.1} parent=1 // pred_region
      _
    $region25: #{meta_prototype_forward.1} parent=1 // pred_fallthru
      _
    // Predicated region
    $region26: #{meta_prototype_forward.1} parent=1 // pred_check
      _
    $region27: #{meta_prototype_forward.1} parent=1 // pred_check_branch
      %1562 = sbr.rel (0) target = $region29
    $region28: #{meta_prototype_forward.1} parent=1 // pred_region
      _
    $region29: #{meta_prototype_forward.1} parent=1 // pred_fallthru
      _
    // Predicated region
    $region30: #{meta_prototype_forward.1} parent=1 // pred_check
      _
    $region31: #{meta_prototype_forward.1} parent=1 // pred_check_branch
      %1564 = sbr.rel (0) target = $region33
    $region32: #{meta_prototype_forward.1} parent=1 // pred_region
      %1565 = dma.done [#allocation3], 256
    $region33: #{meta_prototype_forward.1} parent=1 // pred_fallthru
      _
    // Predicated region
    $region34: #{meta_prototype_forward.1} parent=1 // pred_check
      _
    $region35: #{meta_prototype_forward.1} parent=1 // pred_check_branch
      %1567 = sbr.rel (0) target = $region37
    $region36: #{meta_prototype_forward.1} parent=1 // pred_region
      _
    $region37: #{meta_prototype_forward.1} parent=1 // pred_fallthru
      _
    %1568 = vsyncpa [#allocation3], 1

</llo_original>
